<compile_context>
chip_gen: v7x
topology: tpu7x:2x2x1
jax: 0.10.0
libtpu: 0.0.40
codegen_flags: <defaults>
</compile_context>

<pallas_src>
import jax
import jax.numpy as jnp
from jax.experimental import pallas as pl
from jax.experimental.pallas import tpu as pltpu

NB_CLASSES = 80          # generate_orth(4096, 80) -> proxies (80, 4096)
EMBED_DIM = 4096
SMOOTHING_CONST = 0.1
SCALING_X = 1.0
SCALING_P = 3.0
NORM_EPS = 1e-12         # F.normalize default eps


# ----------------------------------------------------------------------------
# Pure-JAX reference: faithful to the PyTorch forward (full cdist path, f32).
# ----------------------------------------------------------------------------
def _proxynca_reference(X, P, labels):
    X = X.astype(jnp.float32)
    P = P.astype(jnp.float32)

    x_norm = jnp.sqrt(jnp.sum(X * X, axis=-1, keepdims=True))
    Xn = X / jnp.maximum(x_norm, NORM_EPS) * SCALING_X
    p_norm = jnp.sqrt(jnp.sum(P * P, axis=-1, keepdims=True))
    Pn = P / jnp.maximum(p_norm, NORM_EPS) * SCALING_P

    xp = jax.lax.dot_general(
        Xn, Pn, (((1,), (1,)), ((), ())),
        preferred_element_type=jnp.float32,
        precision=jax.lax.Precision.HIGHEST)                       # (N, C)
    xsq = jnp.sum(Xn * Xn, axis=-1, keepdims=True)                 # (N, 1)
    psq = jnp.sum(Pn * Pn, axis=-1)[None, :]                       # (1, C)
    D2 = jnp.maximum(xsq + psq - 2.0 * xp, 0.0)                    # (N, C)

    neg = -D2
    m = jnp.max(neg, axis=-1, keepdims=True)
    shifted = neg - m
    lse = jnp.log(jnp.sum(jnp.exp(shifted), axis=-1, keepdims=True))
    log_sm = shifted - lse

    cls = jax.lax.broadcasted_iota(jnp.int32, (X.shape[0], NB_CLASSES), 1)
    T_sm = jnp.where(cls == labels, 1.0 - SMOOTHING_CONST,
                     SMOOTHING_CONST / (NB_CLASSES - 1)).astype(jnp.float32)

    per_row = jnp.sum(-T_sm * log_sm, axis=-1, keepdims=True)      # (N, 1)
    return jnp.mean(per_row, axis=0, keepdims=True)                # (1, 1)


# ----------------------------------------------------------------------------
# Pallas kernel.
#   t_ref : (N,)  int32, SMEM (scalar prefetch)
#   x_ref : (N, D) f32   raw embeddings
#   p_ref : (C, D) bf16  pre-normalized, pre-scaled proxies
#   out   : (1, 1) f32   mean loss
# ----------------------------------------------------------------------------
def proxynca_kernel(t_ref, x_ref, p_ref, loss_ref):
    n = x_ref.shape[0]
    c = p_ref.shape[0]

    # L2-normalize X rows in f32 (rsqrt -> EUP); fold 2*scaling_x into the row
    # scale so logits = 2 * <x_unit*sx, p_unit*sp> directly (the per-row
    # constant sx^2 + sp^2 of the squared cdist cancels inside log_softmax).
    X = x_ref[...]
    sumsq = jnp.sum(X * X, axis=-1, keepdims=True)
    inv = jax.lax.rsqrt(jnp.maximum(sumsq, NORM_EPS * NORM_EPS)) * (2.0 * SCALING_X)
    Xn = (X * inv).astype(jnp.bfloat16)                            # (N, D) bf16

    # bf16 x bf16 -> f32 accumulate on the MXU (single pass per K-chunk).
    logits = jax.lax.dot_general(
        Xn, p_ref[...], (((1,), (1,)), ((), ())),
        preferred_element_type=jnp.float32)                        # (N, C)

    # log_softmax over classes (C = 80 fits within one lane tile).
    m = jnp.max(logits, axis=-1, keepdims=True)
    shifted = logits - m
    lse = jnp.log(jnp.sum(jnp.exp(shifted), axis=-1, keepdims=True))
    log_sm = shifted - lse

    # Smoothed one-hot targets built from SMEM label scalars (N is small and
    # static: unrolled VPU compares on one (N, C) tile, no (N,1) relayout).
    row_iota = jax.lax.broadcasted_iota(jnp.int32, (n, c), 0)
    col_iota = jax.lax.broadcasted_iota(jnp.int32, (n, c), 1)
    onehot = jnp.zeros((n, c), jnp.bool_)
    for i in range(n):
        onehot = onehot | ((row_iota == i) & (col_iota == t_ref[i]))
    T_sm = jnp.where(onehot, 1.0 - SMOOTHING_CONST,
                     SMOOTHING_CONST / (c - 1)).astype(jnp.float32)

    per_row = jnp.sum(-T_sm * log_sm, axis=-1, keepdims=True)      # (N, 1)
    loss_ref[...] = jnp.mean(per_row, axis=0, keepdims=True)       # (1, 1)


# ----------------------------------------------------------------------------
# Wrappers.
# ----------------------------------------------------------------------------
def prepare_proxies(proxies):
    """Proxies are frozen parameters: normalize + scale once, store as bf16."""
    P = proxies.astype(jnp.float32)
    p_norm = jnp.sqrt(jnp.sum(P * P, axis=-1, keepdims=True))
    Pn = P / jnp.maximum(p_norm, NORM_EPS) * SCALING_P
    return Pn.astype(jnp.bfloat16)


def proxynca_loss(X, proxies_prepared, labels):
    N, D = X.shape
    C, _ = proxies_prepared.shape
    # N=8 -> a single grid step (whole problem < 2 MiB of VMEM).  For large N,
    # tile the batch axis, mark it "parallel" and average partial sums instead.
    grid_spec = pltpu.PrefetchScalarGridSpec(
        num_scalar_prefetch=1,
        grid=(1,),
        in_specs=[
            pl.BlockSpec((N, D), lambda i, t: (0, 0)),   # X (f32)
            pl.BlockSpec((C, D), lambda i, t: (0, 0)),   # proxies (bf16, prenorm)
        ],
        out_specs=pl.BlockSpec((1, 1), lambda i, t: (0, 0)),
    )
    out = pl.pallas_call(
        proxynca_kernel,
        out_shape=jax.ShapeDtypeStruct((1, 1), jnp.float32),
        grid_spec=grid_spec,
    )(labels.astype(jnp.int32), X.astype(jnp.float32), proxies_prepared)
    return out[0, 0]


def generate_orth(feat_in, num_classes, key):
    # Deterministic analogue of generate_orth(): QR of a random (feat_in, C)
    # matrix, transposed -> proxies of shape (num_classes, feat_in).
    rand_mat = jax.random.uniform(key, (feat_in, num_classes), dtype=jnp.float32)
    orth_vec, _ = jnp.linalg.qr(rand_mat)
    return orth_vec.T.astype(jnp.float32)


if __name__ == "__main__":
    key = jax.random.PRNGKey(0)
    k_prox, k_x, k_t = jax.random.split(key, 3)

    proxies = generate_orth(EMBED_DIM, NB_CLASSES, k_prox)           # (80, 4096)

    N = 8
    X = jax.random.normal(k_x, (N, EMBED_DIM), dtype=jnp.float32)    # embeddings
    T = jax.random.randint(k_t, (N,), 0, NB_CLASSES, dtype=jnp.int32)

    proxies_prepared = prepare_proxies(proxies)   # done once (frozen parameter)

    loss = proxynca_loss(X, proxies_prepared, T)
    jax.block_until_ready(loss)

    ref = _proxynca_reference(X, proxies, T.reshape(N, 1))[0, 0]
    assert jnp.allclose(loss, ref, rtol=1e-3, atol=1e-3), (loss, ref)

    print("KERNEL_OK")
</pallas_src>

<mosaic_0001>
module attributes {stable_mosaic.version = 11 : i64} {
  func.func @proxynca_kernel(%arg0: i32, %arg1: memref<8xi32, #tpu.memory_space<smem>>, %arg2: memref<8x4096xf32, #tpu.memory_space<vmem>>, %arg3: memref<80x4096xbf16, #tpu.memory_space<vmem>>, %arg4: memref<1x1xf32, #tpu.memory_space<vmem>>) attributes {dimension_semantics = [#tpu.dimension_semantics<arbitrary>], iteration_bounds = array<i64: 1>, scalar_prefetch = 1 : i64, scratch_operands = 0 : i64, tpu.core_type = #tpu.core_type<tc>, window_params = [{pipeline_mode = #tpu.pipeline_mode<synchronous>, transform_indices = @transform_0, window_bounds = array<i64: 8, 4096>}, {pipeline_mode = #tpu.pipeline_mode<synchronous>, transform_indices = @transform_1, window_bounds = array<i64: 80, 4096>}, {pipeline_mode = #tpu.pipeline_mode<synchronous>, transform_indices = @transform_2, window_bounds = array<i64: 1, 1>}]} {
    %c0 = arith.constant 0 : index
    %c0_0 = arith.constant 0 : index
    %0 = vector.load %arg2[%c0, %c0_0] : memref<8x4096xf32, #tpu.memory_space<vmem>>, vector<8x4096xf32>
    %1 = arith.mulf %0, %0 : vector<8x4096xf32>
    %cst = arith.constant dense<0.000000e+00> : vector<8xf32>
    %2 = vector.multi_reduction <add>, %1, %cst [1] : vector<8x4096xf32> to vector<8xf32>
    %3 = vector.shape_cast %2 : vector<8xf32> to vector<8x1xf32>
    %cst_1 = arith.constant 1.000000e-24 : f32
    %4 = vector.broadcast %cst_1 : f32 to vector<8x1xf32>
    %5 = arith.maximumf %3, %4 : vector<8x1xf32>
    %6 = math.rsqrt %5 : vector<8x1xf32>
    %cst_2 = arith.constant 2.000000e+00 : f32
    %7 = vector.broadcast %cst_2 : f32 to vector<8x1xf32>
    %8 = arith.mulf %6, %7 : vector<8x1xf32>
    %9 = vector.broadcast %8 : vector<8x1xf32> to vector<8x4096xf32>
    %10 = arith.mulf %0, %9 : vector<8x4096xf32>
    %11 = arith.truncf %10 : vector<8x4096xf32> to vector<8x4096xbf16>
    %c0_3 = arith.constant 0 : index
    %c0_4 = arith.constant 0 : index
    %12 = vector.load %arg3[%c0_3, %c0_4] : memref<80x4096xbf16, #tpu.memory_space<vmem>>, vector<80x4096xbf16>
    %cst_5 = arith.constant dense<0.000000e+00> : vector<8x80xf32>
    %13 = tpu.matmul %11, %12, %cst_5 {dimension_numbers = #tpu.dot_dimension_numbers<[1], [1], [0], [0], [0, 0, 1, 0], [], []>} : vector<8x4096xbf16>, vector<80x4096xbf16>, vector<8x80xf32> -> vector<8x80xf32>
    %cst_6 = arith.constant dense<0xFF800000> : vector<8xf32>
    %14 = vector.multi_reduction <maximumf>, %13, %cst_6 [1] : vector<8x80xf32> to vector<8xf32>
    %15 = vector.shape_cast %14 : vector<8xf32> to vector<8x1xf32>
    %16 = vector.broadcast %15 : vector<8x1xf32> to vector<8x80xf32>
    %17 = arith.subf %13, %16 : vector<8x80xf32>
    %18 = math.exp %17 : vector<8x80xf32>
    %cst_7 = arith.constant dense<0.000000e+00> : vector<8xf32>
    %19 = vector.multi_reduction <add>, %18, %cst_7 [1] : vector<8x80xf32> to vector<8xf32>
    %20 = vector.shape_cast %19 : vector<8xf32> to vector<8x1xf32>
    %21 = math.log %20 : vector<8x1xf32>
    %22 = vector.broadcast %21 : vector<8x1xf32> to vector<8x80xf32>
    %23 = arith.subf %17, %22 : vector<8x80xf32>
    %24 = tpu.iota {dimensions = array<i32: 0>} : vector<8x80xi32>
    %25 = tpu.iota {dimensions = array<i32: 1>} : vector<8x80xi32>
    %false = arith.constant false
    %26 = vector.broadcast %false : i1 to vector<8x80xi1>
    %c0_i32 = arith.constant 0 : i32
    %27 = vector.broadcast %c0_i32 : i32 to vector<8x80xi32>
    %28 = arith.cmpi eq, %24, %27 : vector<8x80xi32>
    %c0_8 = arith.constant 0 : index
    %29 = memref.load %arg1[%c0_8] : memref<8xi32, #tpu.memory_space<smem>>
    %30 = vector.broadcast %29 : i32 to vector<8x80xi32>
    %31 = arith.cmpi eq, %25, %30 : vector<8x80xi32>
    %32 = arith.andi %28, %31 : vector<8x80xi1>
    %33 = arith.ori %26, %32 : vector<8x80xi1>
    %c1_i32 = arith.constant 1 : i32
    %34 = vector.broadcast %c1_i32 : i32 to vector<8x80xi32>
    %35 = arith.cmpi eq, %24, %34 : vector<8x80xi32>
    %c1 = arith.constant 1 : index
    %36 = memref.load %arg1[%c1] : memref<8xi32, #tpu.memory_space<smem>>
    %37 = vector.broadcast %36 : i32 to vector<8x80xi32>
    %38 = arith.cmpi eq, %25, %37 : vector<8x80xi32>
    %39 = arith.andi %35, %38 : vector<8x80xi1>
    %40 = arith.ori %33, %39 : vector<8x80xi1>
    %c2_i32 = arith.constant 2 : i32
    %41 = vector.broadcast %c2_i32 : i32 to vector<8x80xi32>
    %42 = arith.cmpi eq, %24, %41 : vector<8x80xi32>
    %c2 = arith.constant 2 : index
    %43 = memref.load %arg1[%c2] : memref<8xi32, #tpu.memory_space<smem>>
    %44 = vector.broadcast %43 : i32 to vector<8x80xi32>
    %45 = arith.cmpi eq, %25, %44 : vector<8x80xi32>
    %46 = arith.andi %42, %45 : vector<8x80xi1>
    %47 = arith.ori %40, %46 : vector<8x80xi1>
    %c3_i32 = arith.constant 3 : i32
    %48 = vector.broadcast %c3_i32 : i32 to vector<8x80xi32>
    %49 = arith.cmpi eq, %24, %48 : vector<8x80xi32>
    %c3 = arith.constant 3 : index
    %50 = memref.load %arg1[%c3] : memref<8xi32, #tpu.memory_space<smem>>
    %51 = vector.broadcast %50 : i32 to vector<8x80xi32>
    %52 = arith.cmpi eq, %25, %51 : vector<8x80xi32>
    %53 = arith.andi %49, %52 : vector<8x80xi1>
    %54 = arith.ori %47, %53 : vector<8x80xi1>
    %c4_i32 = arith.constant 4 : i32
    %55 = vector.broadcast %c4_i32 : i32 to vector<8x80xi32>
    %56 = arith.cmpi eq, %24, %55 : vector<8x80xi32>
    %c4 = arith.constant 4 : index
    %57 = memref.load %arg1[%c4] : memref<8xi32, #tpu.memory_space<smem>>
    %58 = vector.broadcast %57 : i32 to vector<8x80xi32>
    %59 = arith.cmpi eq, %25, %58 : vector<8x80xi32>
    %60 = arith.andi %56, %59 : vector<8x80xi1>
    %61 = arith.ori %54, %60 : vector<8x80xi1>
    %c5_i32 = arith.constant 5 : i32
    %62 = vector.broadcast %c5_i32 : i32 to vector<8x80xi32>
    %63 = arith.cmpi eq, %24, %62 : vector<8x80xi32>
    %c5 = arith.constant 5 : index
    %64 = memref.load %arg1[%c5] : memref<8xi32, #tpu.memory_space<smem>>
    %65 = vector.broadcast %64 : i32 to vector<8x80xi32>
    %66 = arith.cmpi eq, %25, %65 : vector<8x80xi32>
    %67 = arith.andi %63, %66 : vector<8x80xi1>
    %68 = arith.ori %61, %67 : vector<8x80xi1>
    %c6_i32 = arith.constant 6 : i32
    %69 = vector.broadcast %c6_i32 : i32 to vector<8x80xi32>
    %70 = arith.cmpi eq, %24, %69 : vector<8x80xi32>
    %c6 = arith.constant 6 : index
    %71 = memref.load %arg1[%c6] : memref<8xi32, #tpu.memory_space<smem>>
    %72 = vector.broadcast %71 : i32 to vector<8x80xi32>
    %73 = arith.cmpi eq, %25, %72 : vector<8x80xi32>
    %74 = arith.andi %70, %73 : vector<8x80xi1>
    %75 = arith.ori %68, %74 : vector<8x80xi1>
    %c7_i32 = arith.constant 7 : i32
    %76 = vector.broadcast %c7_i32 : i32 to vector<8x80xi32>
    %77 = arith.cmpi eq, %24, %76 : vector<8x80xi32>
    %c7 = arith.constant 7 : index
    %78 = memref.load %arg1[%c7] : memref<8xi32, #tpu.memory_space<smem>>
    %79 = vector.broadcast %78 : i32 to vector<8x80xi32>
    %80 = arith.cmpi eq, %25, %79 : vector<8x80xi32>
    %81 = arith.andi %77, %80 : vector<8x80xi1>
    %82 = arith.ori %75, %81 : vector<8x80xi1>
    %cst_9 = arith.constant 0.899999976 : f32
    %cst_10 = arith.constant 0.00126582279 : f32
    %83 = vector.broadcast %cst_9 : f32 to vector<8x80xf32>
    %84 = vector.broadcast %cst_10 : f32 to vector<8x80xf32>
    %85 = arith.select %82, %83, %84 : vector<8x80xi1>, vector<8x80xf32>
    %cst_11 = arith.constant 0.000000e+00 : f32
    %86 = vector.broadcast %cst_11 : f32 to vector<8x80xf32>
    %87 = arith.subf %86, %85 : vector<8x80xf32>
    %88 = arith.mulf %87, %23 : vector<8x80xf32>
    %cst_12 = arith.constant dense<0.000000e+00> : vector<8xf32>
    %89 = vector.multi_reduction <add>, %88, %cst_12 [1] : vector<8x80xf32> to vector<8xf32>
    %90 = vector.shape_cast %89 : vector<8xf32> to vector<8x1xf32>
    %cst_13 = arith.constant dense<0.000000e+00> : vector<1xf32>
    %91 = vector.multi_reduction <add>, %90, %cst_13 [0] : vector<8x1xf32> to vector<1xf32>
    %92 = vector.shape_cast %91 : vector<1xf32> to vector<1x1xf32>
    %cst_14 = arith.constant 8.000000e+00 : f32
    %93 = vector.broadcast %cst_14 : f32 to vector<1x1xf32>
    %94 = arith.divf %92, %93 : vector<1x1xf32>
    %c0_15 = arith.constant 0 : index
    %c0_16 = arith.constant 0 : index
    %95 = vector.load %arg4[%c0_15, %c0_16] : memref<1x1xf32, #tpu.memory_space<vmem>>, vector<1x1xf32>
    tpu.vector_store %arg4[%c0_15, %c0_16], %94 {strides = array<i32>} : memref<1x1xf32, #tpu.memory_space<vmem>>, vector<1x1xf32>,
    return
  }
  func.func @transform_0(%arg0: i32, %arg1: memref<8xi32, #tpu.memory_space<smem>>) -> (i32, i32) {
    %c0_i32 = arith.constant 0 : i32
    %c0_i32_0 = arith.constant 0 : i32
    %c0_i32_1 = arith.constant 0 : i32
    return %c0_i32, %c0_i32_0 : i32, i32
  }
  func.func @transform_1(%arg0: i32, %arg1: memref<8xi32, #tpu.memory_space<smem>>) -> (i32, i32) {
    %c0_i32 = arith.constant 0 : i32
    %c0_i32_0 = arith.constant 0 : i32
    %c0_i32_1 = arith.constant 0 : i32
    return %c0_i32, %c0_i32_0 : i32, i32
  }
  func.func @transform_2(%arg0: i32, %arg1: memref<8xi32, #tpu.memory_space<smem>>) -> (i32, i32) {
    %c0_i32 = arith.constant 0 : i32
    %c0_i32_0 = arith.constant 0 : i32
    %c0_i32_1 = arith.constant 0 : i32
    return %c0_i32, %c0_i32_0 : i32, i32
  }
}

</mosaic_0001>

<llo_original>
// kernel: tpu_custom_call.1
$region0: #{tpu_custom_call.1}
  #allocation0 [shape = 'u32[]', space=smem, size = 0x4, offset = 0x4, fixed_abs, tag = 'smem constant byte address 0x4 - core index']
  #allocation1 [shape = 'u32[144,128]{1,0:T(1,128)}', space=vmem, size = 0x12000, scoped, tag = 'internal scratch']
  #allocation2 [shape = 's32[1]{0}', space=sflag, size = 0x4, scoped, tag = 'scoped memory for tpu_custom_call.1']
  #allocation3 [shape = 'u8[512]{0}', space=smem, size = 0x200, scoped, tag = 'prefetched SMEM operand 0']
  %s0 = inlined_call_operand.hbm [shape: s32[8], index: 0, kind: input, shape index: {}]
  %s1 = inlined_call_operand.hbm [shape: f32[8,4096], index: 1, kind: input, shape index: {}]
  %s2 = inlined_call_operand.hbm [shape: bf16[80,4096], index: 2, kind: input, shape index: {}]
  %s3 = inlined_call_operand.hbm [shape: f32[1,1], index: 3, kind: output, shape index: {}]
  %s4 = sld [smem:[#allocation0]]
  $region26: #{tpu_custom_call.1} parent=0
    _
  %s6 = ssub.s32 1, %s4
  %s7 = scalar_select 0, %s6, %s4
  %9 = dma.hbm_to_smem %s0, 16, [#allocation3], [#allocation2]
  %10 = dma.done [#allocation2], 16
  %11 = sfence
  $region1: #{tpu_custom_call.1} parent=0
    #allocation4 [shape = 'u8[131072]{0}', space=vmem, size = 0x20000, scoped, tag = 'input window, operand 1, single buffered']
    #allocation5 [shape = 's32[1]{0}', space=sflag, size = 0x4, scoped, tag = 'scoped memory for tpu_custom_call.1']
    #allocation6 [shape = 's32[1]{0}', space=sflag, size = 0x4, scoped, tag = 'scoped memory for tpu_custom_call.1']
    #allocation7 [shape = 'u8[655360]{0}', space=vmem, size = 0xa0000, scoped, tag = 'input window, operand 2, single buffered']
    #allocation8 [shape = 's32[1]{0}', space=sflag, size = 0x4, scoped, tag = 'scoped memory for tpu_custom_call.1']
    #allocation9 [shape = 'u8[512]{0}', space=vmem, size = 0x400, scoped, tag = 'output window, operand 0, single buffered']
    %12 = vsyncpa [#allocation5], 0
    %13 = vsyncpa [#allocation8], 0
    %14 = vsyncpa [#allocation6], 0
    // Predicated region
    $region2: #{tpu_custom_call.1} parent=1 // pred_check
      _
    $region3: #{tpu_custom_call.1} parent=1 // pred_check_branch
      %16 = sbr.rel (0) target = $region5
    $region4: #{tpu_custom_call.1} parent=1 // pred_region
      %s18 = ssub.s32 4096, 4096
      %19 = vsyncadd [#allocation5], %s18
      %s21 = sshll.u32 [#allocation4], 4
      %s22 = int_to_ptr.vmem [resolvable:$true] %s21
      %24 = dma.hbm_to_vmem [thread:$0]  %s1, 4096, %s22, [#allocation5]
    $region5: #{tpu_custom_call.1} parent=1 // pred_fallthru
      _
    // Predicated region
    $region6: #{tpu_custom_call.1} parent=1 // pred_check
      _
    $region7: #{tpu_custom_call.1} parent=1 // pred_check_branch
      %26 = sbr.rel (0) target = $region9
    $region8: #{tpu_custom_call.1} parent=1 // pred_region
      %s28 = ssub.s32 20480, 20480
      %29 = vsyncadd [#allocation8], %s28
      %s30 = sshll.u32 [#allocation7], 4
      %s31 = int_to_ptr.vmem [resolvable:$true] %s30
      %36 = dma.hbm_to_vmem [thread:$0]  %s2, 20480, %s31, [#allocation8], 2048, 2048, 128
    $region9: #{tpu_custom_call.1} parent=1 // pred_fallthru
      _
    // Predicated region
    $region10: #{tpu_custom_call.1} parent=1 // pred_check
      _
    $region11: #{tpu_custom_call.1} parent=1 // pred_check_branch
      %38 = sbr.rel (0) target = $region13
    $region12: #{tpu_custom_call.1} parent=1 // pred_region
      %39 = dma.done [#allocation5], 4096
    $region13: #{tpu_custom_call.1} parent=1 // pred_fallthru
      _
    // Predicated region
    $region14: #{tpu_custom_call.1} parent=1 // pred_check
      _
    $region15: #{tpu_custom_call.1} parent=1 // pred_check_branch
      %41 = sbr.rel (0) target = $region17
    $region16: #{tpu_custom_call.1} parent=1 // pred_region
      %42 = dma.done [#allocation8], 20480
    $region17: #{tpu_custom_call.1} parent=1 // pred_fallthru
      _
    %v44 = vld [vmem:[#allocation4] sm:$0xff]
    %v45 = vld [vmem:[#allocation4 + $0x8] sm:$0xff]
    %v46 = vld [vmem:[#allocation4 + $0x10] sm:$0xff]
    %v47 = vld [vmem:[#allocation4 + $0x18] sm:$0xff]
    %v48 = vld [vmem:[#allocation4 + $0x20] sm:$0xff]
    %v49 = vld [vmem:[#allocation4 + $0x28] sm:$0xff]
    %v50 = vld [vmem:[#allocation4 + $0x30] sm:$0xff]
    %v51 = vld [vmem:[#allocation4 + $0x38] sm:$0xff]
    %v52 = vld [vmem:[#allocation4 + $0x40] sm:$0xff]
    %v53 = vld [vmem:[#allocation4 + $0x48] sm:$0xff]
    %v54 = vld [vmem:[#allocation4 + $0x50] sm:$0xff]
    %v55 = vld [vmem:[#allocation4 + $0x58] sm:$0xff]
    %v56 = vld [vmem:[#allocation4 + $0x60] sm:$0xff]
    %v57 = vld [vmem:[#allocation4 + $0x68] sm:$0xff]
    %v58 = vld [vmem:[#allocation4 + $0x70] sm:$0xff]
    %v59 = vld [vmem:[#allocation4 + $0x78] sm:$0xff]
    %v60 = vld [vmem:[#allocation4 + $0x80] sm:$0xff]
    %v61 = vld [vmem:[#allocation4 + $0x88] sm:$0xff]
    %v62 = vld [vmem:[#allocation4 + $0x90] sm:$0xff]
    %v63 = vld [vmem:[#allocation4 + $0x98] sm:$0xff]
    %v64 = vld [vmem:[#allocation4 + $0xa0] sm:$0xff]
    %v65 = vld [vmem:[#allocation4 + $0xa8] sm:$0xff]
    %v66 = vld [vmem:[#allocation4 + $0xb0] sm:$0xff]
    %v67 = vld [vmem:[#allocation4 + $0xb8] sm:$0xff]
    %v68 = vld [vmem:[#allocation4 + $0xc0] sm:$0xff]
    %v69 = vld [vmem:[#allocation4 + $0xc8] sm:$0xff]
    %v70 = vld [vmem:[#allocation4 + $0xd0] sm:$0xff]
    %v71 = vld [vmem:[#allocation4 + $0xd8] sm:$0xff]
    %v72 = vld [vmem:[#allocation4 + $0xe0] sm:$0xff]
    %v73 = vld [vmem:[#allocation4 + $0xe8] sm:$0xff]
    %v74 = vld [vmem:[#allocation4 + $0xf0] sm:$0xff]
    %v75 = vld [vmem:[#allocation4 + $0xf8] sm:$0xff]
    %v76 = vmul.f32 %v44, %v44
    %v77 = vmul.f32 %v45, %v45
    %v78 = vmul.f32 %v46, %v46
    %v79 = vmul.f32 %v47, %v47
    %v80 = vmul.f32 %v48, %v48
    %v81 = vmul.f32 %v49, %v49
    %v82 = vmul.f32 %v50, %v50
    %v83 = vmul.f32 %v51, %v51
    %v84 = vmul.f32 %v52, %v52
    %v85 = vmul.f32 %v53, %v53
    %v86 = vmul.f32 %v54, %v54
    %v87 = vmul.f32 %v55, %v55
    %v88 = vmul.f32 %v56, %v56
    %v89 = vmul.f32 %v57, %v57
    %v90 = vmul.f32 %v58, %v58
    %v91 = vmul.f32 %v59, %v59
    %v92 = vmul.f32 %v60, %v60
    %v93 = vmul.f32 %v61, %v61
    %v94 = vmul.f32 %v62, %v62
    %v95 = vmul.f32 %v63, %v63
    %v96 = vmul.f32 %v64, %v64
    %v97 = vmul.f32 %v65, %v65
    %v98 = vmul.f32 %v66, %v66
    %v99 = vmul.f32 %v67, %v67
    %v100 = vmul.f32 %v68, %v68
    %v101 = vmul.f32 %v69, %v69
    %v102 = vmul.f32 %v70, %v70
    %v103 = vmul.f32 %v71, %v71
    %v104 = vmul.f32 %v72, %v72
    %v105 = vmul.f32 %v73, %v73
    %v106 = vmul.f32 %v74, %v74
    %v107 = vmul.f32 %v75, %v75
    %v108 = vadd.f32 %v76, %v77
    %v109 = vadd.f32 %v108, %v78
    %v110 = vadd.f32 %v109, %v79
    %v111 = vadd.f32 %v110, %v80
    %v112 = vadd.f32 %v111, %v81
    %v113 = vadd.f32 %v112, %v82
    %v114 = vadd.f32 %v113, %v83
    %v115 = vadd.f32 %v114, %v84
    %v116 = vadd.f32 %v115, %v85
    %v117 = vadd.f32 %v116, %v86
    %v118 = vadd.f32 %v117, %v87
    %v119 = vadd.f32 %v118, %v88
    %v120 = vadd.f32 %v119, %v89
    %v121 = vadd.f32 %v120, %v90
    %v122 = vadd.f32 %v121, %v91
    %v123 = vadd.f32 %v122, %v92
    %v124 = vadd.f32 %v123, %v93
    %v125 = vadd.f32 %v124, %v94
    %v126 = vadd.f32 %v125, %v95
    %v127 = vadd.f32 %v126, %v96
    %v128 = vadd.f32 %v127, %v97
    %v129 = vadd.f32 %v128, %v98
    %v130 = vadd.f32 %v129, %v99
    %v131 = vadd.f32 %v130, %v100
    %v132 = vadd.f32 %v131, %v101
    %v133 = vadd.f32 %v132, %v102
    %v134 = vadd.f32 %v133, %v103
    %v135 = vadd.f32 %v134, %v104
    %v136 = vadd.f32 %v135, %v105
    %v137 = vadd.f32 %v136, %v106
    %v138 = vadd.f32 %v137, %v107
    %139 = vadd.xlane.f32.xlu0 %v138
    %v140 = vpop.xlane.xlu0 %139
    %v141 = vmax.f32 %v140, 1e-24
    %v142 = vrsqrt.pop %v141
    %v143 = vmul.f32 %v142, 2.0
    %v144 = vmul.f32 %v44, %v143
    %v145 = vmul.f32 %v45, %v143
    %v146 = vmul.f32 %v46, %v143
    %v147 = vmul.f32 %v47, %v143
    %v148 = vmul.f32 %v48, %v143
    %v149 = vmul.f32 %v49, %v143
    %v150 = vmul.f32 %v50, %v143
    %v151 = vmul.f32 %v51, %v143
    %v152 = vmul.f32 %v52, %v143
    %v153 = vmul.f32 %v53, %v143
    %v154 = vmul.f32 %v54, %v143
    %v155 = vmul.f32 %v55, %v143
    %v156 = vmul.f32 %v56, %v143
    %v157 = vmul.f32 %v57, %v143
    %v158 = vmul.f32 %v58, %v143
    %v159 = vmul.f32 %v59, %v143
    %v160 = vmul.f32 %v60, %v143
    %v161 = vmul.f32 %v61, %v143
    %v162 = vmul.f32 %v62, %v143
    %v163 = vmul.f32 %v63, %v143
    %v164 = vmul.f32 %v64, %v143
    %v165 = vmul.f32 %v65, %v143
    %v166 = vmul.f32 %v66, %v143
    %v167 = vmul.f32 %v67, %v143
    %v168 = vmul.f32 %v68, %v143
    %v169 = vmul.f32 %v69, %v143
    %v170 = vmul.f32 %v70, %v143
    %v171 = vmul.f32 %v71, %v143
    %v172 = vmul.f32 %v72, %v143
    %v173 = vmul.f32 %v73, %v143
    %v174 = vmul.f32 %v74, %v143
    %v175 = vmul.f32 %v75, %v143
    %v176 = vpack.c.bf16 %v144, %v144
    %v177 = vpack.c.bf16 %v145, %v145
    %v178 = vpack.c.bf16 %v146, %v146
    %v179 = vpack.c.bf16 %v147, %v147
    %v180 = vpack.c.bf16 %v148, %v148
    %v181 = vpack.c.bf16 %v149, %v149
    %v182 = vpack.c.bf16 %v150, %v150
    %v183 = vpack.c.bf16 %v151, %v151
    %v184 = vpack.c.bf16 %v152, %v152
    %v185 = vpack.c.bf16 %v153, %v153
    %v186 = vpack.c.bf16 %v154, %v154
    %v187 = vpack.c.bf16 %v155, %v155
    %v188 = vpack.c.bf16 %v156, %v156
    %v189 = vpack.c.bf16 %v157, %v157
    %v190 = vpack.c.bf16 %v158, %v158
    %v191 = vpack.c.bf16 %v159, %v159
    %v192 = vpack.c.bf16 %v160, %v160
    %v193 = vpack.c.bf16 %v161, %v161
    %v194 = vpack.c.bf16 %v162, %v162
    %v195 = vpack.c.bf16 %v163, %v163
    %v196 = vpack.c.bf16 %v164, %v164
    %v197 = vpack.c.bf16 %v165, %v165
    %v198 = vpack.c.bf16 %v166, %v166
    %v199 = vpack.c.bf16 %v167, %v167
    %v200 = vpack.c.bf16 %v168, %v168
    %v201 = vpack.c.bf16 %v169, %v169
    %v202 = vpack.c.bf16 %v170, %v170
    %v203 = vpack.c.bf16 %v171, %v171
    %v204 = vpack.c.bf16 %v172, %v172
    %v205 = vpack.c.bf16 %v173, %v173
    %v206 = vpack.c.bf16 %v174, %v174
    %v207 = vpack.c.bf16 %v175, %v175
    %v208 = vld [vmem:[#allocation7] sm:$0xff]
    %v209 = vld [vmem:[#allocation7 + $0x8] sm:$0xff]
    %v210 = vld [vmem:[#allocation7 + $0x10] sm:$0xff]
    %v211 = vld [vmem:[#allocation7 + $0x18] sm:$0xff]
    %v212 = vld [vmem:[#allocation7 + $0x20] sm:$0xff]
    %v213 = vld [vmem:[#allocation7 + $0x28] sm:$0xff]
    %v214 = vld [vmem:[#allocation7 + $0x30] sm:$0xff]
    %v215 = vld [vmem:[#allocation7 + $0x38] sm:$0xff]
    %v216 = vld [vmem:[#allocation7 + $0x40] sm:$0xff]
    %v217 = vld [vmem:[#allocation7 + $0x48] sm:$0xff]
    %v218 = vld [vmem:[#allocation7 + $0x50] sm:$0xff]
    %v219 = vld [vmem:[#allocation7 + $0x58] sm:$0xff]
    %v220 = vld [vmem:[#allocation7 + $0x60] sm:$0xff]
    %v221 = vld [vmem:[#allocation7 + $0x68] sm:$0xff]
    %v222 = vld [vmem:[#allocation7 + $0x70] sm:$0xff]
    %v223 = vld [vmem:[#allocation7 + $0x78] sm:$0xff]
    %v224 = vld [vmem:[#allocation7 + $0x80] sm:$0xff]
    %v225 = vld [vmem:[#allocation7 + $0x88] sm:$0xff]
    %v226 = vld [vmem:[#allocation7 + $0x90] sm:$0xff]
    %v227 = vld [vmem:[#allocation7 + $0x98] sm:$0xff]
    %v228 = vld [vmem:[#allocation7 + $0xa0] sm:$0xff]
    %v229 = vld [vmem:[#allocation7 + $0xa8] sm:$0xff]
    %v230 = vld [vmem:[#allocation7 + $0xb0] sm:$0xff]
    %v231 = vld [vmem:[#allocation7 + $0xb8] sm:$0xff]
    %v232 = vld [vmem:[#allocation7 + $0xc0] sm:$0xff]
    %v233 = vld [vmem:[#allocation7 + $0xc8] sm:$0xff]
    %v234 = vld [vmem:[#allocation7 + $0xd0] sm:$0xff]
    %v235 = vld [vmem:[#allocation7 + $0xd8] sm:$0xff]
    %v236 = vld [vmem:[#allocation7 + $0xe0] sm:$0xff]
    %v237 = vld [vmem:[#allocation7 + $0xe8] sm:$0xff]
    %v238 = vld [vmem:[#allocation7 + $0xf0] sm:$0xff]
    %v239 = vld [vmem:[#allocation7 + $0xf8] sm:$0xff]
    %v240 = vld [vmem:[#allocation7 + $0x100] sm:$0xff]
    %v241 = vld [vmem:[#allocation7 + $0x108] sm:$0xff]
    %v242 = vld [vmem:[#allocation7 + $0x110] sm:$0xff]
    %v243 = vld [vmem:[#allocation7 + $0x118] sm:$0xff]
    %v244 = vld [vmem:[#allocation7 + $0x120] sm:$0xff]
    %v245 = vld [vmem:[#allocation7 + $0x128] sm:$0xff]
    %v246 = vld [vmem:[#allocation7 + $0x130] sm:$0xff]
    %v247 = vld [vmem:[#allocation7 + $0x138] sm:$0xff]
    %v248 = vld [vmem:[#allocation7 + $0x140] sm:$0xff]
    %v249 = vld [vmem:[#allocation7 + $0x148] sm:$0xff]
    %v250 = vld [vmem:[#allocation7 + $0x150] sm:$0xff]
    %v251 = vld [vmem:[#allocation7 + $0x158] sm:$0xff]
    %v252 = vld [vmem:[#allocation7 + $0x160] sm:$0xff]
    %v253 = vld [vmem:[#allocation7 + $0x168] sm:$0xff]
    %v254 = vld [vmem:[#allocation7 + $0x170] sm:$0xff]
    %v255 = vld [vmem:[#allocation7 + $0x178] sm:$0xff]
    %v256 = vld [vmem:[#allocation7 + $0x180] sm:$0xff]
    %v257 = vld [vmem:[#allocation7 + $0x188] sm:$0xff]
    %v258 = vld [vmem:[#allocation7 + $0x190] sm:$0xff]
    %v259 = vld [vmem:[#allocation7 + $0x198] sm:$0xff]
    %v260 = vld [vmem:[#allocation7 + $0x1a0] sm:$0xff]
    %v261 = vld [vmem:[#allocation7 + $0x1a8] sm:$0xff]
    %v262 = vld [vmem:[#allocation7 + $0x1b0] sm:$0xff]
    %v263 = vld [vmem:[#allocation7 + $0x1b8] sm:$0xff]
    %v264 = vld [vmem:[#allocation7 + $0x1c0] sm:$0xff]
    %v265 = vld [vmem:[#allocation7 + $0x1c8] sm:$0xff]
    %v266 = vld [vmem:[#allocation7 + $0x1d0] sm:$0xff]
    %v267 = vld [vmem:[#allocation7 + $0x1d8] sm:$0xff]
    %v268 = vld [vmem:[#allocation7 + $0x1e0] sm:$0xff]
    %v269 = vld [vmem:[#allocation7 + $0x1e8] sm:$0xff]
    %v270 = vld [vmem:[#allocation7 + $0x1f0] sm:$0xff]
    %v271 = vld [vmem:[#allocation7 + $0x1f8] sm:$0xff]
    %v272 = vld [vmem:[#allocation7 + $0x200] sm:$0xff]
    %v273 = vld [vmem:[#allocation7 + $0x208] sm:$0xff]
    %v274 = vld [vmem:[#allocation7 + $0x210] sm:$0xff]
    %v275 = vld [vmem:[#allocation7 + $0x218] sm:$0xff]
    %v276 = vld [vmem:[#allocation7 + $0x220] sm:$0xff]
    %v277 = vld [vmem:[#allocation7 + $0x228] sm:$0xff]
    %v278 = vld [vmem:[#allocation7 + $0x230] sm:$0xff]
    %v279 = vld [vmem:[#allocation7 + $0x238] sm:$0xff]
    %v280 = vld [vmem:[#allocation7 + $0x240] sm:$0xff]
    %v281 = vld [vmem:[#allocation7 + $0x248] sm:$0xff]
    %v282 = vld [vmem:[#allocation7 + $0x250] sm:$0xff]
    %v283 = vld [vmem:[#allocation7 + $0x258] sm:$0xff]
    %v284 = vld [vmem:[#allocation7 + $0x260] sm:$0xff]
    %v285 = vld [vmem:[#allocation7 + $0x268] sm:$0xff]
    %v286 = vld [vmem:[#allocation7 + $0x270] sm:$0xff]
    %v287 = vld [vmem:[#allocation7 + $0x278] sm:$0xff]
    %v288 = vld [vmem:[#allocation7 + $0x280] sm:$0xff]
    %v289 = vld [vmem:[#allocation7 + $0x288] sm:$0xff]
    %v290 = vld [vmem:[#allocation7 + $0x290] sm:$0xff]
    %v291 = vld [vmem:[#allocation7 + $0x298] sm:$0xff]
    %v292 = vld [vmem:[#allocation7 + $0x2a0] sm:$0xff]
    %v293 = vld [vmem:[#allocation7 + $0x2a8] sm:$0xff]
    %v294 = vld [vmem:[#allocation7 + $0x2b0] sm:$0xff]
    %v295 = vld [vmem:[#allocation7 + $0x2b8] sm:$0xff]
    %v296 = vld [vmem:[#allocation7 + $0x2c0] sm:$0xff]
    %v297 = vld [vmem:[#allocation7 + $0x2c8] sm:$0xff]
    %v298 = vld [vmem:[#allocation7 + $0x2d0] sm:$0xff]
    %v299 = vld [vmem:[#allocation7 + $0x2d8] sm:$0xff]
    %v300 = vld [vmem:[#allocation7 + $0x2e0] sm:$0xff]
    %v301 = vld [vmem:[#allocation7 + $0x2e8] sm:$0xff]
    %v302 = vld [vmem:[#allocation7 + $0x2f0] sm:$0xff]
    %v303 = vld [vmem:[#allocation7 + $0x2f8] sm:$0xff]
    %v304 = vld [vmem:[#allocation7 + $0x300] sm:$0xff]
    %v305 = vld [vmem:[#allocation7 + $0x308] sm:$0xff]
    %v306 = vld [vmem:[#allocation7 + $0x310] sm:$0xff]
    %v307 = vld [vmem:[#allocation7 + $0x318] sm:$0xff]
    %v308 = vld [vmem:[#allocation7 + $0x320] sm:$0xff]
    %v309 = vld [vmem:[#allocation7 + $0x328] sm:$0xff]
    %v310 = vld [vmem:[#allocation7 + $0x330] sm:$0xff]
    %v311 = vld [vmem:[#allocation7 + $0x338] sm:$0xff]
    %v312 = vld [vmem:[#allocation7 + $0x340] sm:$0xff]
    %v313 = vld [vmem:[#allocation7 + $0x348] sm:$0xff]
    %v314 = vld [vmem:[#allocation7 + $0x350] sm:$0xff]
    %v315 = vld [vmem:[#allocation7 + $0x358] sm:$0xff]
    %v316 = vld [vmem:[#allocation7 + $0x360] sm:$0xff]
    %v317 = vld [vmem:[#allocation7 + $0x368] sm:$0xff]
    %v318 = vld [vmem:[#allocation7 + $0x370] sm:$0xff]
    %v319 = vld [vmem:[#allocation7 + $0x378] sm:$0xff]
    %v320 = vld [vmem:[#allocation7 + $0x380] sm:$0xff]
    %v321 = vld [vmem:[#allocation7 + $0x388] sm:$0xff]
    %v322 = vld [vmem:[#allocation7 + $0x390] sm:$0xff]
    %v323 = vld [vmem:[#allocation7 + $0x398] sm:$0xff]
    %v324 = vld [vmem:[#allocation7 + $0x3a0] sm:$0xff]
    %v325 = vld [vmem:[#allocation7 + $0x3a8] sm:$0xff]
    %v326 = vld [vmem:[#allocation7 + $0x3b0] sm:$0xff]
    %v327 = vld [vmem:[#allocation7 + $0x3b8] sm:$0xff]
    %v328 = vld [vmem:[#allocation7 + $0x3c0] sm:$0xff]
    %v329 = vld [vmem:[#allocation7 + $0x3c8] sm:$0xff]
    %v330 = vld [vmem:[#allocation7 + $0x3d0] sm:$0xff]
    %v331 = vld [vmem:[#allocation7 + $0x3d8] sm:$0xff]
    %v332 = vld [vmem:[#allocation7 + $0x3e0] sm:$0xff]
    %v333 = vld [vmem:[#allocation7 + $0x3e8] sm:$0xff]
    %v334 = vld [vmem:[#allocation7 + $0x3f0] sm:$0xff]
    %v335 = vld [vmem:[#allocation7 + $0x3f8] sm:$0xff]
    %v336 = vld [vmem:[#allocation7 + $0x400] sm:$0xff]
    %v337 = vld [vmem:[#allocation7 + $0x408] sm:$0xff]
    %v338 = vld [vmem:[#allocation7 + $0x410] sm:$0xff]
    %v339 = vld [vmem:[#allocation7 + $0x418] sm:$0xff]
    %v340 = vld [vmem:[#allocation7 + $0x420] sm:$0xff]
    %v341 = vld [vmem:[#allocation7 + $0x428] sm:$0xff]
    %v342 = vld [vmem:[#allocation7 + $0x430] sm:$0xff]
    %v343 = vld [vmem:[#allocation7 + $0x438] sm:$0xff]
    %v344 = vld [vmem:[#allocation7 + $0x440] sm:$0xff]
    %v345 = vld [vmem:[#allocation7 + $0x448] sm:$0xff]
    %v346 = vld [vmem:[#allocation7 + $0x450] sm:$0xff]
    %v347 = vld [vmem:[#allocation7 + $0x458] sm:$0xff]
    %v348 = vld [vmem:[#allocation7 + $0x460] sm:$0xff]
    %v349 = vld [vmem:[#allocation7 + $0x468] sm:$0xff]
    %v350 = vld [vmem:[#allocation7 + $0x470] sm:$0xff]
    %v351 = vld [vmem:[#allocation7 + $0x478] sm:$0xff]
    %v352 = vld [vmem:[#allocation7 + $0x480] sm:$0xff]
    %v353 = vld [vmem:[#allocation7 + $0x488] sm:$0xff]
    %v354 = vld [vmem:[#allocation7 + $0x490] sm:$0xff]
    %v355 = vld [vmem:[#allocation7 + $0x498] sm:$0xff]
    %v356 = vld [vmem:[#allocation7 + $0x4a0] sm:$0xff]
    %v357 = vld [vmem:[#allocation7 + $0x4a8] sm:$0xff]
    %v358 = vld [vmem:[#allocation7 + $0x4b0] sm:$0xff]
    %v359 = vld [vmem:[#allocation7 + $0x4b8] sm:$0xff]
    %v360 = vld [vmem:[#allocation7 + $0x4c0] sm:$0xff]
    %v361 = vld [vmem:[#allocation7 + $0x4c8] sm:$0xff]
    %v362 = vld [vmem:[#allocation7 + $0x4d0] sm:$0xff]
    %v363 = vld [vmem:[#allocation7 + $0x4d8] sm:$0xff]
    %v364 = vld [vmem:[#allocation7 + $0x4e0] sm:$0xff]
    %v365 = vld [vmem:[#allocation7 + $0x4e8] sm:$0xff]
    %v366 = vld [vmem:[#allocation7 + $0x4f0] sm:$0xff]
    %v367 = vld [vmem:[#allocation7 + $0x4f8] sm:$0xff]
    %v528 = vunpack.c.l.b16 %v208
    %v529 = vunpack.c.h.b16 %v208
    %v530 = vunpack.c.l.b16 %v209
    %v531 = vunpack.c.h.b16 %v209
    %v532 = vunpack.c.l.b16 %v210
    %v533 = vunpack.c.h.b16 %v210
    %v534 = vunpack.c.l.b16 %v211
    %v535 = vunpack.c.h.b16 %v211
    %v536 = vunpack.c.l.b16 %v212
    %v537 = vunpack.c.h.b16 %v212
    %v538 = vunpack.c.l.b16 %v213
    %v539 = vunpack.c.h.b16 %v213
    %v540 = vunpack.c.l.b16 %v214
    %v541 = vunpack.c.h.b16 %v214
    %v542 = vunpack.c.l.b16 %v215
    %v543 = vunpack.c.h.b16 %v215
    %v544 = vunpack.c.l.b16 %v216
    %v545 = vunpack.c.h.b16 %v216
    %v546 = vunpack.c.l.b16 %v217
    %v547 = vunpack.c.h.b16 %v217
    %v548 = vunpack.c.l.b16 %v218
    %v549 = vunpack.c.h.b16 %v218
    %v550 = vunpack.c.l.b16 %v219
    %v551 = vunpack.c.h.b16 %v219
    %v552 = vunpack.c.l.b16 %v220
    %v553 = vunpack.c.h.b16 %v220
    %v554 = vunpack.c.l.b16 %v221
    %v555 = vunpack.c.h.b16 %v221
    %v556 = vunpack.c.l.b16 %v222
    %v557 = vunpack.c.h.b16 %v222
    %v558 = vunpack.c.l.b16 %v223
    %v559 = vunpack.c.h.b16 %v223
    %v560 = vunpack.c.l.b16 %v224
    %v561 = vunpack.c.h.b16 %v224
    %v562 = vunpack.c.l.b16 %v225
    %v563 = vunpack.c.h.b16 %v225
    %v564 = vunpack.c.l.b16 %v226
    %v565 = vunpack.c.h.b16 %v226
    %v566 = vunpack.c.l.b16 %v227
    %v567 = vunpack.c.h.b16 %v227
    %v568 = vunpack.c.l.b16 %v228
    %v569 = vunpack.c.h.b16 %v228
    %v570 = vunpack.c.l.b16 %v229
    %v571 = vunpack.c.h.b16 %v229
    %v572 = vunpack.c.l.b16 %v230
    %v573 = vunpack.c.h.b16 %v230
    %v574 = vunpack.c.l.b16 %v231
    %v575 = vunpack.c.h.b16 %v231
    %v576 = vunpack.c.l.b16 %v232
    %v577 = vunpack.c.h.b16 %v232
    %v578 = vunpack.c.l.b16 %v233
    %v579 = vunpack.c.h.b16 %v233
    %v580 = vunpack.c.l.b16 %v234
    %v581 = vunpack.c.h.b16 %v234
    %v582 = vunpack.c.l.b16 %v235
    %v583 = vunpack.c.h.b16 %v235
    %v584 = vunpack.c.l.b16 %v236
    %v585 = vunpack.c.h.b16 %v236
    %v586 = vunpack.c.l.b16 %v237
    %v587 = vunpack.c.h.b16 %v237
    %v588 = vunpack.c.l.b16 %v238
    %v589 = vunpack.c.h.b16 %v238
    %v590 = vunpack.c.l.b16 %v239
    %v591 = vunpack.c.h.b16 %v239
    %v592 = vunpack.c.l.b16 %v240
    %v593 = vunpack.c.h.b16 %v240
    %v594 = vunpack.c.l.b16 %v241
    %v595 = vunpack.c.h.b16 %v241
    %v596 = vunpack.c.l.b16 %v242
    %v597 = vunpack.c.h.b16 %v242
    %v598 = vunpack.c.l.b16 %v243
    %v599 = vunpack.c.h.b16 %v243
    %v600 = vunpack.c.l.b16 %v244
    %v601 = vunpack.c.h.b16 %v244
    %v602 = vunpack.c.l.b16 %v245
    %v603 = vunpack.c.h.b16 %v245
    %v604 = vunpack.c.l.b16 %v246
    %v605 = vunpack.c.h.b16 %v246
    %v606 = vunpack.c.l.b16 %v247
    %v607 = vunpack.c.h.b16 %v247
    %v608 = vunpack.c.l.b16 %v248
    %v609 = vunpack.c.h.b16 %v248
    %v610 = vunpack.c.l.b16 %v249
    %v611 = vunpack.c.h.b16 %v249
    %v612 = vunpack.c.l.b16 %v250
    %v613 = vunpack.c.h.b16 %v250
    %v614 = vunpack.c.l.b16 %v251
    %v615 = vunpack.c.h.b16 %v251
    %v616 = vunpack.c.l.b16 %v252
    %v617 = vunpack.c.h.b16 %v252
    %v618 = vunpack.c.l.b16 %v253
    %v619 = vunpack.c.h.b16 %v253
    %v620 = vunpack.c.l.b16 %v254
    %v621 = vunpack.c.h.b16 %v254
    %v622 = vunpack.c.l.b16 %v255
    %v623 = vunpack.c.h.b16 %v255
    %v624 = vunpack.c.l.b16 %v256
    %v625 = vunpack.c.h.b16 %v256
    %v626 = vunpack.c.l.b16 %v257
    %v627 = vunpack.c.h.b16 %v257
    %v628 = vunpack.c.l.b16 %v258
    %v629 = vunpack.c.h.b16 %v258
    %v630 = vunpack.c.l.b16 %v259
    %v631 = vunpack.c.h.b16 %v259
    %v632 = vunpack.c.l.b16 %v260
    %v633 = vunpack.c.h.b16 %v260
    %v634 = vunpack.c.l.b16 %v261
    %v635 = vunpack.c.h.b16 %v261
    %v636 = vunpack.c.l.b16 %v262
    %v637 = vunpack.c.h.b16 %v262
    %v638 = vunpack.c.l.b16 %v263
    %v639 = vunpack.c.h.b16 %v263
    %v640 = vunpack.c.l.b16 %v264
    %v641 = vunpack.c.h.b16 %v264
    %v642 = vunpack.c.l.b16 %v265
    %v643 = vunpack.c.h.b16 %v265
    %v644 = vunpack.c.l.b16 %v266
    %v645 = vunpack.c.h.b16 %v266
    %v646 = vunpack.c.l.b16 %v267
    %v647 = vunpack.c.h.b16 %v267
    %v648 = vunpack.c.l.b16 %v268
    %v649 = vunpack.c.h.b16 %v268
    %v650 = vunpack.c.l.b16 %v269
    %v651 = vunpack.c.h.b16 %v269
    %v652 = vunpack.c.l.b16 %v270
    %v653 = vunpack.c.h.b16 %v270
    %v654 = vunpack.c.l.b16 %v271
    %v655 = vunpack.c.h.b16 %v271
    %v656 = vunpack.c.l.b16 %v272
    %v657 = vunpack.c.h.b16 %v272
    %v658 = vunpack.c.l.b16 %v273
    %v659 = vunpack.c.h.b16 %v273
    %v660 = vunpack.c.l.b16 %v274
    %v661 = vunpack.c.h.b16 %v274
    %v662 = vunpack.c.l.b16 %v275
    %v663 = vunpack.c.h.b16 %v275
    %v664 = vunpack.c.l.b16 %v276
    %v665 = vunpack.c.h.b16 %v276
    %v666 = vunpack.c.l.b16 %v277
    %v667 = vunpack.c.h.b16 %v277
    %v668 = vunpack.c.l.b16 %v278
    %v669 = vunpack.c.h.b16 %v278
    %v670 = vunpack.c.l.b16 %v279
    %v671 = vunpack.c.h.b16 %v279
    %v672 = vunpack.c.l.b16 %v280
    %v673 = vunpack.c.h.b16 %v280
    %v674 = vunpack.c.l.b16 %v281
    %v675 = vunpack.c.h.b16 %v281
    %v676 = vunpack.c.l.b16 %v282
    %v677 = vunpack.c.h.b16 %v282
    %v678 = vunpack.c.l.b16 %v283
    %v679 = vunpack.c.h.b16 %v283
    %v680 = vunpack.c.l.b16 %v284
    %v681 = vunpack.c.h.b16 %v284
    %v682 = vunpack.c.l.b16 %v285
    %v683 = vunpack.c.h.b16 %v285
    %v684 = vunpack.c.l.b16 %v286
    %v685 = vunpack.c.h.b16 %v286
    %v686 = vunpack.c.l.b16 %v287
    %v687 = vunpack.c.h.b16 %v287
    %v688 = vunpack.c.l.b16 %v288
    %v689 = vunpack.c.h.b16 %v288
    %v690 = vunpack.c.l.b16 %v289
    %v691 = vunpack.c.h.b16 %v289
    %v692 = vunpack.c.l.b16 %v290
    %v693 = vunpack.c.h.b16 %v290
    %v694 = vunpack.c.l.b16 %v291
    %v695 = vunpack.c.h.b16 %v291
    %v696 = vunpack.c.l.b16 %v292
    %v697 = vunpack.c.h.b16 %v292
    %v698 = vunpack.c.l.b16 %v293
    %v699 = vunpack.c.h.b16 %v293
    %v700 = vunpack.c.l.b16 %v294
    %v701 = vunpack.c.h.b16 %v294
    %v702 = vunpack.c.l.b16 %v295
    %v703 = vunpack.c.h.b16 %v295
    %v704 = vunpack.c.l.b16 %v296
    %v705 = vunpack.c.h.b16 %v296
    %v706 = vunpack.c.l.b16 %v297
    %v707 = vunpack.c.h.b16 %v297
    %v708 = vunpack.c.l.b16 %v298
    %v709 = vunpack.c.h.b16 %v298
    %v710 = vunpack.c.l.b16 %v299
    %v711 = vunpack.c.h.b16 %v299
    %v712 = vunpack.c.l.b16 %v300
    %v713 = vunpack.c.h.b16 %v300
    %v714 = vunpack.c.l.b16 %v301
    %v715 = vunpack.c.h.b16 %v301
    %v716 = vunpack.c.l.b16 %v302
    %v717 = vunpack.c.h.b16 %v302
    %v718 = vunpack.c.l.b16 %v303
    %v719 = vunpack.c.h.b16 %v303
    %v720 = vunpack.c.l.b16 %v304
    %v721 = vunpack.c.h.b16 %v304
    %v722 = vunpack.c.l.b16 %v305
    %v723 = vunpack.c.h.b16 %v305
    %v724 = vunpack.c.l.b16 %v306
    %v725 = vunpack.c.h.b16 %v306
    %v726 = vunpack.c.l.b16 %v307
    %v727 = vunpack.c.h.b16 %v307
    %v728 = vunpack.c.l.b16 %v308
    %v729 = vunpack.c.h.b16 %v308
    %v730 = vunpack.c.l.b16 %v309
    %v731 = vunpack.c.h.b16 %v309
    %v732 = vunpack.c.l.b16 %v310
    %v733 = vunpack.c.h.b16 %v310
    %v734 = vunpack.c.l.b16 %v311
    %v735 = vunpack.c.h.b16 %v311
    %v736 = vunpack.c.l.b16 %v312
    %v737 = vunpack.c.h.b16 %v312
    %v738 = vunpack.c.l.b16 %v313
    %v739 = vunpack.c.h.b16 %v313
    %v740 = vunpack.c.l.b16 %v314
    %v741 = vunpack.c.h.b16 %v314
    %v742 = vunpack.c.l.b16 %v315
    %v743 = vunpack.c.h.b16 %v315
    %v744 = vunpack.c.l.b16 %v316
    %v745 = vunpack.c.h.b16 %v316
    %v746 = vunpack.c.l.b16 %v317
    %v747 = vunpack.c.h.b16 %v317
    %v748 = vunpack.c.l.b16 %v318
    %v749 = vunpack.c.h.b16 %v318
    %v750 = vunpack.c.l.b16 %v319
    %v751 = vunpack.c.h.b16 %v319
    %v752 = vunpack.c.l.b16 %v320
    %v753 = vunpack.c.h.b16 %v320
    %v754 = vunpack.c.l.b16 %v321
    %v755 = vunpack.c.h.b16 %v321
    %v756 = vunpack.c.l.b16 %v322
    %v757 = vunpack.c.h.b16 %v322
    %v758 = vunpack.c.l.b16 %v323
    %v759 = vunpack.c.h.b16 %v323
    %v760 = vunpack.c.l.b16 %v324
    %v761 = vunpack.c.h.b16 %v324
    %v762 = vunpack.c.l.b16 %v325
    %v763 = vunpack.c.h.b16 %v325
    %v764 = vunpack.c.l.b16 %v326
    %v765 = vunpack.c.h.b16 %v326
    %v766 = vunpack.c.l.b16 %v327
    %v767 = vunpack.c.h.b16 %v327
    %v768 = vunpack.c.l.b16 %v328
    %v769 = vunpack.c.h.b16 %v328
    %v770 = vunpack.c.l.b16 %v329
    %v771 = vunpack.c.h.b16 %v329
    %v772 = vunpack.c.l.b16 %v330
    %v773 = vunpack.c.h.b16 %v330
    %v774 = vunpack.c.l.b16 %v331
    %v775 = vunpack.c.h.b16 %v331
    %v776 = vunpack.c.l.b16 %v332
    %v777 = vunpack.c.h.b16 %v332
    %v778 = vunpack.c.l.b16 %v333
    %v779 = vunpack.c.h.b16 %v333
    %v780 = vunpack.c.l.b16 %v334
    %v781 = vunpack.c.h.b16 %v334
    %v782 = vunpack.c.l.b16 %v335
    %v783 = vunpack.c.h.b16 %v335
    %v784 = vunpack.c.l.b16 %v336
    %v785 = vunpack.c.h.b16 %v336
    %v786 = vunpack.c.l.b16 %v337
    %v787 = vunpack.c.h.b16 %v337
    %v788 = vunpack.c.l.b16 %v338
    %v789 = vunpack.c.h.b16 %v338
    %v790 = vunpack.c.l.b16 %v339
    %v791 = vunpack.c.h.b16 %v339
    %v792 = vunpack.c.l.b16 %v340
    %v793 = vunpack.c.h.b16 %v340
    %v794 = vunpack.c.l.b16 %v341
    %v795 = vunpack.c.h.b16 %v341
    %v796 = vunpack.c.l.b16 %v342
    %v797 = vunpack.c.h.b16 %v342
    %v798 = vunpack.c.l.b16 %v343
    %v799 = vunpack.c.h.b16 %v343
    %v800 = vunpack.c.l.b16 %v344
    %v801 = vunpack.c.h.b16 %v344
    %v802 = vunpack.c.l.b16 %v345
    %v803 = vunpack.c.h.b16 %v345
    %v804 = vunpack.c.l.b16 %v346
    %v805 = vunpack.c.h.b16 %v346
    %v806 = vunpack.c.l.b16 %v347
    %v807 = vunpack.c.h.b16 %v347
    %v808 = vunpack.c.l.b16 %v348
    %v809 = vunpack.c.h.b16 %v348
    %v810 = vunpack.c.l.b16 %v349
    %v811 = vunpack.c.h.b16 %v349
    %v812 = vunpack.c.l.b16 %v350
    %v813 = vunpack.c.h.b16 %v350
    %v814 = vunpack.c.l.b16 %v351
    %v815 = vunpack.c.h.b16 %v351
    %v816 = vunpack.c.l.b16 %v352
    %v817 = vunpack.c.h.b16 %v352
    %v818 = vunpack.c.l.b16 %v353
    %v819 = vunpack.c.h.b16 %v353
    %v820 = vunpack.c.l.b16 %v354
    %v821 = vunpack.c.h.b16 %v354
    %v822 = vunpack.c.l.b16 %v355
    %v823 = vunpack.c.h.b16 %v355
    %v824 = vunpack.c.l.b16 %v356
    %v825 = vunpack.c.h.b16 %v356
    %v826 = vunpack.c.l.b16 %v357
    %v827 = vunpack.c.h.b16 %v357
    %v828 = vunpack.c.l.b16 %v358
    %v829 = vunpack.c.h.b16 %v358
    %v830 = vunpack.c.l.b16 %v359
    %v831 = vunpack.c.h.b16 %v359
    %v832 = vunpack.c.l.b16 %v360
    %v833 = vunpack.c.h.b16 %v360
    %v834 = vunpack.c.l.b16 %v361
    %v835 = vunpack.c.h.b16 %v361
    %v836 = vunpack.c.l.b16 %v362
    %v837 = vunpack.c.h.b16 %v362
    %v838 = vunpack.c.l.b16 %v363
    %v839 = vunpack.c.h.b16 %v363
    %v840 = vunpack.c.l.b16 %v364
    %v841 = vunpack.c.h.b16 %v364
    %v842 = vunpack.c.l.b16 %v365
    %v843 = vunpack.c.h.b16 %v365
    %v844 = vunpack.c.l.b16 %v366
    %v845 = vunpack.c.h.b16 %v366
    %v846 = vunpack.c.l.b16 %v367
    %v847 = vunpack.c.h.b16 %v367
    %v848 = vpack.c.b16 %v560, %v528
    %v849 = vpack.c.b16 %v561, %v529
    %v850 = vpack.c.b16 %v562, %v530
    %v851 = vpack.c.b16 %v563, %v531
    %v852 = vpack.c.b16 %v564, %v532
    %v853 = vpack.c.b16 %v565, %v533
    %v854 = vpack.c.b16 %v566, %v534
    %v855 = vpack.c.b16 %v567, %v535
    %v856 = vpack.c.b16 %v568, %v536
    %v857 = vpack.c.b16 %v569, %v537
    %v858 = vpack.c.b16 %v570, %v538
    %v859 = vpack.c.b16 %v571, %v539
    %v860 = vpack.c.b16 %v572, %v540
    %v861 = vpack.c.b16 %v573, %v541
    %v862 = vpack.c.b16 %v574, %v542
    %v863 = vpack.c.b16 %v575, %v543
    %v864 = vpack.c.b16 %v576, %v544
    %v865 = vpack.c.b16 %v577, %v545
    %v866 = vpack.c.b16 %v578, %v546
    %v867 = vpack.c.b16 %v579, %v547
    %v868 = vpack.c.b16 %v580, %v548
    %v869 = vpack.c.b16 %v581, %v549
    %v870 = vpack.c.b16 %v582, %v550
    %v871 = vpack.c.b16 %v583, %v551
    %v872 = vpack.c.b16 %v584, %v552
    %v873 = vpack.c.b16 %v585, %v553
    %v874 = vpack.c.b16 %v586, %v554
    %v875 = vpack.c.b16 %v587, %v555
    %v876 = vpack.c.b16 %v588, %v556
    %v877 = vpack.c.b16 %v589, %v557
    %v878 = vpack.c.b16 %v590, %v558
    %v879 = vpack.c.b16 %v591, %v559
    %v880 = vpack.c.b16 %v624, %v592
    %v881 = vpack.c.b16 %v625, %v593
    %v882 = vpack.c.b16 %v626, %v594
    %v883 = vpack.c.b16 %v627, %v595
    %v884 = vpack.c.b16 %v628, %v596
    %v885 = vpack.c.b16 %v629, %v597
    %v886 = vpack.c.b16 %v630, %v598
    %v887 = vpack.c.b16 %v631, %v599
    %v888 = vpack.c.b16 %v632, %v600
    %v889 = vpack.c.b16 %v633, %v601
    %v890 = vpack.c.b16 %v634, %v602
    %v891 = vpack.c.b16 %v635, %v603
    %v892 = vpack.c.b16 %v636, %v604
    %v893 = vpack.c.b16 %v637, %v605
    %v894 = vpack.c.b16 %v638, %v606
    %v895 = vpack.c.b16 %v639, %v607
    %v896 = vpack.c.b16 %v640, %v608
    %v897 = vpack.c.b16 %v641, %v609
    %v898 = vpack.c.b16 %v642, %v610
    %v899 = vpack.c.b16 %v643, %v611
    %v900 = vpack.c.b16 %v644, %v612
    %v901 = vpack.c.b16 %v645, %v613
    %v902 = vpack.c.b16 %v646, %v614
    %v903 = vpack.c.b16 %v647, %v615
    %v904 = vpack.c.b16 %v648, %v616
    %v905 = vpack.c.b16 %v649, %v617
    %v906 = vpack.c.b16 %v650, %v618
    %v907 = vpack.c.b16 %v651, %v619
    %v908 = vpack.c.b16 %v652, %v620
    %v909 = vpack.c.b16 %v653, %v621
    %v910 = vpack.c.b16 %v654, %v622
    %v911 = vpack.c.b16 %v655, %v623
    %v912 = vpack.c.b16 %v688, %v656
    %v913 = vpack.c.b16 %v689, %v657
    %v914 = vpack.c.b16 %v690, %v658
    %v915 = vpack.c.b16 %v691, %v659
    %v916 = vpack.c.b16 %v692, %v660
    %v917 = vpack.c.b16 %v693, %v661
    %v918 = vpack.c.b16 %v694, %v662
    %v919 = vpack.c.b16 %v695, %v663
    %v920 = vpack.c.b16 %v696, %v664
    %v921 = vpack.c.b16 %v697, %v665
    %v922 = vpack.c.b16 %v698, %v666
    %v923 = vpack.c.b16 %v699, %v667
    %v924 = vpack.c.b16 %v700, %v668
    %v925 = vpack.c.b16 %v701, %v669
    %v926 = vpack.c.b16 %v702, %v670
    %v927 = vpack.c.b16 %v703, %v671
    %v928 = vpack.c.b16 %v704, %v672
    %v929 = vpack.c.b16 %v705, %v673
    %v930 = vpack.c.b16 %v706, %v674
    %v931 = vpack.c.b16 %v707, %v675
    %v932 = vpack.c.b16 %v708, %v676
    %v933 = vpack.c.b16 %v709, %v677
    %v934 = vpack.c.b16 %v710, %v678
    %v935 = vpack.c.b16 %v711, %v679
    %v936 = vpack.c.b16 %v712, %v680
    %v937 = vpack.c.b16 %v713, %v681
    %v938 = vpack.c.b16 %v714, %v682
    %v939 = vpack.c.b16 %v715, %v683
    %v940 = vpack.c.b16 %v716, %v684
    %v941 = vpack.c.b16 %v717, %v685
    %v942 = vpack.c.b16 %v718, %v686
    %v943 = vpack.c.b16 %v719, %v687
    %v944 = vpack.c.b16 %v752, %v720
    %v945 = vpack.c.b16 %v753, %v721
    %v946 = vpack.c.b16 %v754, %v722
    %v947 = vpack.c.b16 %v755, %v723
    %v948 = vpack.c.b16 %v756, %v724
    %v949 = vpack.c.b16 %v757, %v725
    %v950 = vpack.c.b16 %v758, %v726
    %v951 = vpack.c.b16 %v759, %v727
    %v952 = vpack.c.b16 %v760, %v728
    %v953 = vpack.c.b16 %v761, %v729
    %v954 = vpack.c.b16 %v762, %v730
    %v955 = vpack.c.b16 %v763, %v731
    %v956 = vpack.c.b16 %v764, %v732
    %v957 = vpack.c.b16 %v765, %v733
    %v958 = vpack.c.b16 %v766, %v734
    %v959 = vpack.c.b16 %v767, %v735
    %v960 = vpack.c.b16 %v768, %v736
    %v961 = vpack.c.b16 %v769, %v737
    %v962 = vpack.c.b16 %v770, %v738
    %v963 = vpack.c.b16 %v771, %v739
    %v964 = vpack.c.b16 %v772, %v740
    %v965 = vpack.c.b16 %v773, %v741
    %v966 = vpack.c.b16 %v774, %v742
    %v967 = vpack.c.b16 %v775, %v743
    %v968 = vpack.c.b16 %v776, %v744
    %v969 = vpack.c.b16 %v777, %v745
    %v970 = vpack.c.b16 %v778, %v746
    %v971 = vpack.c.b16 %v779, %v747
    %v972 = vpack.c.b16 %v780, %v748
    %v973 = vpack.c.b16 %v781, %v749
    %v974 = vpack.c.b16 %v782, %v750
    %v975 = vpack.c.b16 %v783, %v751
    %v976 = vpack.c.b16 %v816, %v784
    %v977 = vpack.c.b16 %v817, %v785
    %v978 = vpack.c.b16 %v818, %v786
    %v979 = vpack.c.b16 %v819, %v787
    %v980 = vpack.c.b16 %v820, %v788
    %v981 = vpack.c.b16 %v821, %v789
    %v982 = vpack.c.b16 %v822, %v790
    %v983 = vpack.c.b16 %v823, %v791
    %v984 = vpack.c.b16 %v824, %v792
    %v985 = vpack.c.b16 %v825, %v793
    %v986 = vpack.c.b16 %v826, %v794
    %v987 = vpack.c.b16 %v827, %v795
    %v988 = vpack.c.b16 %v828, %v796
    %v989 = vpack.c.b16 %v829, %v797
    %v990 = vpack.c.b16 %v830, %v798
    %v991 = vpack.c.b16 %v831, %v799
    %v992 = vpack.c.b16 %v832, %v800
    %v993 = vpack.c.b16 %v833, %v801
    %v994 = vpack.c.b16 %v834, %v802
    %v995 = vpack.c.b16 %v835, %v803
    %v996 = vpack.c.b16 %v836, %v804
    %v997 = vpack.c.b16 %v837, %v805
    %v998 = vpack.c.b16 %v838, %v806
    %v999 = vpack.c.b16 %v839, %v807
    %v1000 = vpack.c.b16 %v840, %v808
    %v1001 = vpack.c.b16 %v841, %v809
    %v1002 = vpack.c.b16 %v842, %v810
    %v1003 = vpack.c.b16 %v843, %v811
    %v1004 = vpack.c.b16 %v844, %v812
    %v1005 = vpack.c.b16 %v845, %v813
    %v1006 = vpack.c.b16 %v846, %v814
    %v1007 = vpack.c.b16 %v847, %v815
    %1168 = vmatprep.subr.bf16.mxu0 %v849
    %1169 = vmatpush1.bf16.xpose.msra.mxu0 %v848
    %1170 = vmatprep.subr.bf16.mxu0 %v881
    %1171 = vmatpush1.bf16.xpose.msra.mxu0 %v880
    %1172 = vmatprep.subr.bf16.mxu0 %v913
    %1173 = vmatpush1.bf16.xpose.msra.mxu0 %v912
    %1174 = vmatprep.subr.bf16.mxu0 %v945
    %1175 = vmatpush1.bf16.xpose.msra.mxu0 %v944
    %1176 = vmatprep.subr.bf16.mxu0 %v977
    %1177 = vmatpush1.bf16.xpose.msra.mxu0 %v976
    %1178 = vmatprep.subr.bf16.mxu0 0
    %1179 = vmatpush1.bf16.xpose.msra.mxu0 0
    %1180 = vmatprep.subr.bf16.mxu0 0
    %1181 = vmatpush1.bf16.xpose.msra.mxu0 0
    %1182 = vmatprep.subr.bf16.mxu0 0
    %1183 = vmatpush1.bf16.xpose.msra.mxu0 0
    %1184 = vmatprep.subr.bf16.mxu0 0
    %1185 = vmatpush1.bf16.xpose.msra.mxu0 0
    %1186 = vmatprep.subr.bf16.mxu0 0
    %1187 = vmatpush1.bf16.xpose.msra.mxu0 0
    %1188 = vmatprep.subr.bf16.mxu0 0
    %1189 = vmatpush1.bf16.xpose.msra.mxu0 0
    %1190 = vmatprep.subr.bf16.mxu0 0
    %1191 = vmatpush1.bf16.xpose.msra.mxu0 0
    %1192 = vmatprep.subr.bf16.mxu0 0
    %1193 = vmatpush1.bf16.xpose.msra.mxu0 0
    %1194 = vmatprep.subr.bf16.mxu0 0
    %1195 = vmatpush1.bf16.xpose.msra.mxu0 0
    %1196 = vmatprep.subr.bf16.mxu0 0
    %1197 = vmatpush1.bf16.xpose.msra.mxu0 0
    %1198 = vmatprep.subr.bf16.mxu0 0
    %1199 = vmatpush1.bf16.xpose.msra.mxu0 0
    %1200 = vmatprep.mubr.bf16.mxu0 %v177
    %1201 = vmatmul.mubr.bf16.gmra.mrb[0].mxu0 %v176
    %v1202 = vpop.f32.mrb[0].mxu0
    %v1203 = vadd.f32 0.0, %v1202
    %v1204 = vpop.f32.mrb[0].mxu0
    %v1205 = vpop.f32.mrb[0].mxu0
    %v1206 = vpop.f32.mrb[0].mxu0
    %1207 = vdwg.mxu0
    %1208 = vmatprep.subr.bf16.mxu0 %v851
    %1209 = vmatpush1.bf16.xpose.msra.mxu0 %v850
    %1210 = vmatprep.subr.bf16.mxu0 %v883
    %1211 = vmatpush1.bf16.xpose.msra.mxu0 %v882
    %1212 = vmatprep.subr.bf16.mxu0 %v915
    %1213 = vmatpush1.bf16.xpose.msra.mxu0 %v914
    %1214 = vmatprep.subr.bf16.mxu0 %v947
    %1215 = vmatpush1.bf16.xpose.msra.mxu0 %v946
    %1216 = vmatprep.subr.bf16.mxu0 %v979
    %1217 = vmatpush1.bf16.xpose.msra.mxu0 %v978
    %1218 = vmatprep.subr.bf16.mxu0 0
    %1219 = vmatpush1.bf16.xpose.msra.mxu0 0
    %1220 = vmatprep.subr.bf16.mxu0 0
    %1221 = vmatpush1.bf16.xpose.msra.mxu0 0
    %1222 = vmatprep.subr.bf16.mxu0 0
    %1223 = vmatpush1.bf16.xpose.msra.mxu0 0
    %1224 = vmatprep.subr.bf16.mxu0 0
    %1225 = vmatpush1.bf16.xpose.msra.mxu0 0
    %1226 = vmatprep.subr.bf16.mxu0 0
    %1227 = vmatpush1.bf16.xpose.msra.mxu0 0
    %1228 = vmatprep.subr.bf16.mxu0 0
    %1229 = vmatpush1.bf16.xpose.msra.mxu0 0
    %1230 = vmatprep.subr.bf16.mxu0 0
    %1231 = vmatpush1.bf16.xpose.msra.mxu0 0
    %1232 = vmatprep.subr.bf16.mxu0 0
    %1233 = vmatpush1.bf16.xpose.msra.mxu0 0
    %1234 = vmatprep.subr.bf16.mxu0 0
    %1235 = vmatpush1.bf16.xpose.msra.mxu0 0
    %1236 = vmatprep.subr.bf16.mxu0 0
    %1237 = vmatpush1.bf16.xpose.msra.mxu0 0
    %1238 = vmatprep.subr.bf16.mxu0 0
    %1239 = vmatpush1.bf16.xpose.msra.mxu0 0
    %1240 = vmatprep.mubr.bf16.mxu0 %v179
    %1241 = vmatmul.mubr.bf16.gmra.mrb[0].mxu0 %v178
    %v1242 = vpop.f32.mrb[0].mxu0
    %v1243 = vadd.f32 %v1203, %v1242
    %v1244 = vpop.f32.mrb[0].mxu0
    %v1245 = vpop.f32.mrb[0].mxu0
    %v1246 = vpop.f32.mrb[0].mxu0
    %1247 = vdwg.mxu0
    %1248 = vmatprep.subr.bf16.mxu0 %v853
    %1249 = vmatpush1.bf16.xpose.msra.mxu0 %v852
    %1250 = vmatprep.subr.bf16.mxu0 %v885
    %1251 = vmatpush1.bf16.xpose.msra.mxu0 %v884
    %1252 = vmatprep.subr.bf16.mxu0 %v917
    %1253 = vmatpush1.bf16.xpose.msra.mxu0 %v916
    %1254 = vmatprep.subr.bf16.mxu0 %v949
    %1255 = vmatpush1.bf16.xpose.msra.mxu0 %v948
    %1256 = vmatprep.subr.bf16.mxu0 %v981
    %1257 = vmatpush1.bf16.xpose.msra.mxu0 %v980
    %1258 = vmatprep.subr.bf16.mxu0 0
    %1259 = vmatpush1.bf16.xpose.msra.mxu0 0
    %1260 = vmatprep.subr.bf16.mxu0 0
    %1261 = vmatpush1.bf16.xpose.msra.mxu0 0
    %1262 = vmatprep.subr.bf16.mxu0 0
    %1263 = vmatpush1.bf16.xpose.msra.mxu0 0
    %1264 = vmatprep.subr.bf16.mxu0 0
    %1265 = vmatpush1.bf16.xpose.msra.mxu0 0
    %1266 = vmatprep.subr.bf16.mxu0 0
    %1267 = vmatpush1.bf16.xpose.msra.mxu0 0
    %1268 = vmatprep.subr.bf16.mxu0 0
    %1269 = vmatpush1.bf16.xpose.msra.mxu0 0
    %1270 = vmatprep.subr.bf16.mxu0 0
    %1271 = vmatpush1.bf16.xpose.msra.mxu0 0
    %1272 = vmatprep.subr.bf16.mxu0 0
    %1273 = vmatpush1.bf16.xpose.msra.mxu0 0
    %1274 = vmatprep.subr.bf16.mxu0 0
    %1275 = vmatpush1.bf16.xpose.msra.mxu0 0
    %1276 = vmatprep.subr.bf16.mxu0 0
    %1277 = vmatpush1.bf16.xpose.msra.mxu0 0
    %1278 = vmatprep.subr.bf16.mxu0 0
    %1279 = vmatpush1.bf16.xpose.msra.mxu0 0
    %1280 = vmatprep.mubr.bf16.mxu0 %v181
    %1281 = vmatmul.mubr.bf16.gmra.mrb[0].mxu0 %v180
    %v1282 = vpop.f32.mrb[0].mxu0
    %v1283 = vadd.f32 %v1243, %v1282
    %v1284 = vpop.f32.mrb[0].mxu0
    %v1285 = vpop.f32.mrb[0].mxu0
    %v1286 = vpop.f32.mrb[0].mxu0
    %1287 = vdwg.mxu0
    %1288 = vmatprep.subr.bf16.mxu0 %v855
    %1289 = vmatpush1.bf16.xpose.msra.mxu0 %v854
    %1290 = vmatprep.subr.bf16.mxu0 %v887
    %1291 = vmatpush1.bf16.xpose.msra.mxu0 %v886
    %1292 = vmatprep.subr.bf16.mxu0 %v919
    %1293 = vmatpush1.bf16.xpose.msra.mxu0 %v918
    %1294 = vmatprep.subr.bf16.mxu0 %v951
    %1295 = vmatpush1.bf16.xpose.msra.mxu0 %v950
    %1296 = vmatprep.subr.bf16.mxu0 %v983
    %1297 = vmatpush1.bf16.xpose.msra.mxu0 %v982
    %1298 = vmatprep.subr.bf16.mxu0 0
    %1299 = vmatpush1.bf16.xpose.msra.mxu0 0
    %1300 = vmatprep.subr.bf16.mxu0 0
    %1301 = vmatpush1.bf16.xpose.msra.mxu0 0
    %1302 = vmatprep.subr.bf16.mxu0 0
    %1303 = vmatpush1.bf16.xpose.msra.mxu0 0
    %1304 = vmatprep.subr.bf16.mxu0 0
    %1305 = vmatpush1.bf16.xpose.msra.mxu0 0
    %1306 = vmatprep.subr.bf16.mxu0 0
    %1307 = vmatpush1.bf16.xpose.msra.mxu0 0
    %1308 = vmatprep.subr.bf16.mxu0 0
    %1309 = vmatpush1.bf16.xpose.msra.mxu0 0
    %1310 = vmatprep.subr.bf16.mxu0 0
    %1311 = vmatpush1.bf16.xpose.msra.mxu0 0
    %1312 = vmatprep.subr.bf16.mxu0 0
    %1313 = vmatpush1.bf16.xpose.msra.mxu0 0
    %1314 = vmatprep.subr.bf16.mxu0 0
    %1315 = vmatpush1.bf16.xpose.msra.mxu0 0
    %1316 = vmatprep.subr.bf16.mxu0 0
    %1317 = vmatpush1.bf16.xpose.msra.mxu0 0
    %1318 = vmatprep.subr.bf16.mxu0 0
    %1319 = vmatpush1.bf16.xpose.msra.mxu0 0
    %1320 = vmatprep.mubr.bf16.mxu0 %v183
    %1321 = vmatmul.mubr.bf16.gmra.mrb[0].mxu0 %v182
    %v1322 = vpop.f32.mrb[0].mxu0
    %v1323 = vadd.f32 %v1283, %v1322
    %v1324 = vpop.f32.mrb[0].mxu0
    %v1325 = vpop.f32.mrb[0].mxu0
    %v1326 = vpop.f32.mrb[0].mxu0
    %1327 = vdwg.mxu0
    %1328 = vmatprep.subr.bf16.mxu0 %v857
    %1329 = vmatpush1.bf16.xpose.msra.mxu0 %v856
    %1330 = vmatprep.subr.bf16.mxu0 %v889
    %1331 = vmatpush1.bf16.xpose.msra.mxu0 %v888
    %1332 = vmatprep.subr.bf16.mxu0 %v921
    %1333 = vmatpush1.bf16.xpose.msra.mxu0 %v920
    %1334 = vmatprep.subr.bf16.mxu0 %v953
    %1335 = vmatpush1.bf16.xpose.msra.mxu0 %v952
    %1336 = vmatprep.subr.bf16.mxu0 %v985
    %1337 = vmatpush1.bf16.xpose.msra.mxu0 %v984
    %1338 = vmatprep.subr.bf16.mxu0 0
    %1339 = vmatpush1.bf16.xpose.msra.mxu0 0
    %1340 = vmatprep.subr.bf16.mxu0 0
    %1341 = vmatpush1.bf16.xpose.msra.mxu0 0
    %1342 = vmatprep.subr.bf16.mxu0 0
    %1343 = vmatpush1.bf16.xpose.msra.mxu0 0
    %1344 = vmatprep.subr.bf16.mxu0 0
    %1345 = vmatpush1.bf16.xpose.msra.mxu0 0
    %1346 = vmatprep.subr.bf16.mxu0 0
    %1347 = vmatpush1.bf16.xpose.msra.mxu0 0
    %1348 = vmatprep.subr.bf16.mxu0 0
    %1349 = vmatpush1.bf16.xpose.msra.mxu0 0
    %1350 = vmatprep.subr.bf16.mxu0 0
    %1351 = vmatpush1.bf16.xpose.msra.mxu0 0
    %1352 = vmatprep.subr.bf16.mxu0 0
    %1353 = vmatpush1.bf16.xpose.msra.mxu0 0
    %1354 = vmatprep.subr.bf16.mxu0 0
    %1355 = vmatpush1.bf16.xpose.msra.mxu0 0
    %1356 = vmatprep.subr.bf16.mxu0 0
    %1357 = vmatpush1.bf16.xpose.msra.mxu0 0
    %1358 = vmatprep.subr.bf16.mxu0 0
    %1359 = vmatpush1.bf16.xpose.msra.mxu0 0
    %1360 = vmatprep.mubr.bf16.mxu0 %v185
    %1361 = vmatmul.mubr.bf16.gmra.mrb[0].mxu0 %v184
    %v1362 = vpop.f32.mrb[0].mxu0
    %v1363 = vadd.f32 %v1323, %v1362
    %v1364 = vpop.f32.mrb[0].mxu0
    %v1365 = vpop.f32.mrb[0].mxu0
    %v1366 = vpop.f32.mrb[0].mxu0
    %1367 = vdwg.mxu0
    %1368 = vmatprep.subr.bf16.mxu0 %v859
    %1369 = vmatpush1.bf16.xpose.msra.mxu0 %v858
    %1370 = vmatprep.subr.bf16.mxu0 %v891
    %1371 = vmatpush1.bf16.xpose.msra.mxu0 %v890
    %1372 = vmatprep.subr.bf16.mxu0 %v923
    %1373 = vmatpush1.bf16.xpose.msra.mxu0 %v922
    %1374 = vmatprep.subr.bf16.mxu0 %v955
    %1375 = vmatpush1.bf16.xpose.msra.mxu0 %v954
    %1376 = vmatprep.subr.bf16.mxu0 %v987
    %1377 = vmatpush1.bf16.xpose.msra.mxu0 %v986
    %1378 = vmatprep.subr.bf16.mxu0 0
    %1379 = vmatpush1.bf16.xpose.msra.mxu0 0
    %1380 = vmatprep.subr.bf16.mxu0 0
    %1381 = vmatpush1.bf16.xpose.msra.mxu0 0
    %1382 = vmatprep.subr.bf16.mxu0 0
    %1383 = vmatpush1.bf16.xpose.msra.mxu0 0
    %1384 = vmatprep.subr.bf16.mxu0 0
    %1385 = vmatpush1.bf16.xpose.msra.mxu0 0
    %1386 = vmatprep.subr.bf16.mxu0 0
    %1387 = vmatpush1.bf16.xpose.msra.mxu0 0
    %1388 = vmatprep.subr.bf16.mxu0 0
    %1389 = vmatpush1.bf16.xpose.msra.mxu0 0
    %1390 = vmatprep.subr.bf16.mxu0 0
    %1391 = vmatpush1.bf16.xpose.msra.mxu0 0
    %1392 = vmatprep.subr.bf16.mxu0 0
    %1393 = vmatpush1.bf16.xpose.msra.mxu0 0
    %1394 = vmatprep.subr.bf16.mxu0 0
    %1395 = vmatpush1.bf16.xpose.msra.mxu0 0
    %1396 = vmatprep.subr.bf16.mxu0 0
    %1397 = vmatpush1.bf16.xpose.msra.mxu0 0
    %1398 = vmatprep.subr.bf16.mxu0 0
    %1399 = vmatpush1.bf16.xpose.msra.mxu0 0
    %1400 = vmatprep.mubr.bf16.mxu0 %v187
    %1401 = vmatmul.mubr.bf16.gmra.mrb[0].mxu0 %v186
    %v1402 = vpop.f32.mrb[0].mxu0
    %v1403 = vadd.f32 %v1363, %v1402
    %v1404 = vpop.f32.mrb[0].mxu0
    %v1405 = vpop.f32.mrb[0].mxu0
    %v1406 = vpop.f32.mrb[0].mxu0
    %1407 = vdwg.mxu0
    %1408 = vmatprep.subr.bf16.mxu0 %v861
    %1409 = vmatpush1.bf16.xpose.msra.mxu0 %v860
    %1410 = vmatprep.subr.bf16.mxu0 %v893
    %1411 = vmatpush1.bf16.xpose.msra.mxu0 %v892
    %1412 = vmatprep.subr.bf16.mxu0 %v925
    %1413 = vmatpush1.bf16.xpose.msra.mxu0 %v924
    %1414 = vmatprep.subr.bf16.mxu0 %v957
    %1415 = vmatpush1.bf16.xpose.msra.mxu0 %v956
    %1416 = vmatprep.subr.bf16.mxu0 %v989
    %1417 = vmatpush1.bf16.xpose.msra.mxu0 %v988
    %1418 = vmatprep.subr.bf16.mxu0 0
    %1419 = vmatpush1.bf16.xpose.msra.mxu0 0
    %1420 = vmatprep.subr.bf16.mxu0 0
    %1421 = vmatpush1.bf16.xpose.msra.mxu0 0
    %1422 = vmatprep.subr.bf16.mxu0 0
    %1423 = vmatpush1.bf16.xpose.msra.mxu0 0
    %1424 = vmatprep.subr.bf16.mxu0 0
    %1425 = vmatpush1.bf16.xpose.msra.mxu0 0
    %1426 = vmatprep.subr.bf16.mxu0 0
    %1427 = vmatpush1.bf16.xpose.msra.mxu0 0
    %1428 = vmatprep.subr.bf16.mxu0 0
    %1429 = vmatpush1.bf16.xpose.msra.mxu0 0
    %1430 = vmatprep.subr.bf16.mxu0 0
    %1431 = vmatpush1.bf16.xpose.msra.mxu0 0
    %1432 = vmatprep.subr.bf16.mxu0 0
    %1433 = vmatpush1.bf16.xpose.msra.mxu0 0
    %1434 = vmatprep.subr.bf16.mxu0 0
    %1435 = vmatpush1.bf16.xpose.msra.mxu0 0
    %1436 = vmatprep.subr.bf16.mxu0 0
    %1437 = vmatpush1.bf16.xpose.msra.mxu0 0
    %1438 = vmatprep.subr.bf16.mxu0 0
    %1439 = vmatpush1.bf16.xpose.msra.mxu0 0
    %1440 = vmatprep.mubr.bf16.mxu0 %v189
    %1441 = vmatmul.mubr.bf16.gmra.mrb[0].mxu0 %v188
    %v1442 = vpop.f32.mrb[0].mxu0
    %v1443 = vadd.f32 %v1403, %v1442
    %v1444 = vpop.f32.mrb[0].mxu0
    %v1445 = vpop.f32.mrb[0].mxu0
    %v1446 = vpop.f32.mrb[0].mxu0
    %1447 = vdwg.mxu0
    %1448 = vmatprep.subr.bf16.mxu0 %v863
    %1449 = vmatpush1.bf16.xpose.msra.mxu0 %v862
    %1450 = vmatprep.subr.bf16.mxu0 %v895
    %1451 = vmatpush1.bf16.xpose.msra.mxu0 %v894
    %1452 = vmatprep.subr.bf16.mxu0 %v927
    %1453 = vmatpush1.bf16.xpose.msra.mxu0 %v926
    %1454 = vmatprep.subr.bf16.mxu0 %v959
    %1455 = vmatpush1.bf16.xpose.msra.mxu0 %v958
    %1456 = vmatprep.subr.bf16.mxu0 %v991
    %1457 = vmatpush1.bf16.xpose.msra.mxu0 %v990
    %1458 = vmatprep.subr.bf16.mxu0 0
    %1459 = vmatpush1.bf16.xpose.msra.mxu0 0
    %1460 = vmatprep.subr.bf16.mxu0 0
    %1461 = vmatpush1.bf16.xpose.msra.mxu0 0
    %1462 = vmatprep.subr.bf16.mxu0 0
    %1463 = vmatpush1.bf16.xpose.msra.mxu0 0
    %1464 = vmatprep.subr.bf16.mxu0 0
    %1465 = vmatpush1.bf16.xpose.msra.mxu0 0
    %1466 = vmatprep.subr.bf16.mxu0 0
    %1467 = vmatpush1.bf16.xpose.msra.mxu0 0
    %1468 = vmatprep.subr.bf16.mxu0 0
    %1469 = vmatpush1.bf16.xpose.msra.mxu0 0
    %1470 = vmatprep.subr.bf16.mxu0 0
    %1471 = vmatpush1.bf16.xpose.msra.mxu0 0
    %1472 = vmatprep.subr.bf16.mxu0 0
    %1473 = vmatpush1.bf16.xpose.msra.mxu0 0
    %1474 = vmatprep.subr.bf16.mxu0 0
    %1475 = vmatpush1.bf16.xpose.msra.mxu0 0
    %1476 = vmatprep.subr.bf16.mxu0 0
    %1477 = vmatpush1.bf16.xpose.msra.mxu0 0
    %1478 = vmatprep.subr.bf16.mxu0 0
    %1479 = vmatpush1.bf16.xpose.msra.mxu0 0
    %1480 = vmatprep.mubr.bf16.mxu0 %v191
    %1481 = vmatmul.mubr.bf16.gmra.mrb[0].mxu0 %v190
    %v1482 = vpop.f32.mrb[0].mxu0
    %v1483 = vadd.f32 %v1443, %v1482
    %v1484 = vpop.f32.mrb[0].mxu0
    %v1485 = vpop.f32.mrb[0].mxu0
    %v1486 = vpop.f32.mrb[0].mxu0
    %1487 = vdwg.mxu0
    %1488 = vmatprep.subr.bf16.mxu0 %v865
    %1489 = vmatpush1.bf16.xpose.msra.mxu0 %v864
    %1490 = vmatprep.subr.bf16.mxu0 %v897
    %1491 = vmatpush1.bf16.xpose.msra.mxu0 %v896
    %1492 = vmatprep.subr.bf16.mxu0 %v929
    %1493 = vmatpush1.bf16.xpose.msra.mxu0 %v928
    %1494 = vmatprep.subr.bf16.mxu0 %v961
    %1495 = vmatpush1.bf16.xpose.msra.mxu0 %v960
    %1496 = vmatprep.subr.bf16.mxu0 %v993
    %1497 = vmatpush1.bf16.xpose.msra.mxu0 %v992
    %1498 = vmatprep.subr.bf16.mxu0 0
    %1499 = vmatpush1.bf16.xpose.msra.mxu0 0
    %1500 = vmatprep.subr.bf16.mxu0 0
    %1501 = vmatpush1.bf16.xpose.msra.mxu0 0
    %1502 = vmatprep.subr.bf16.mxu0 0
    %1503 = vmatpush1.bf16.xpose.msra.mxu0 0
    %1504 = vmatprep.subr.bf16.mxu0 0
    %1505 = vmatpush1.bf16.xpose.msra.mxu0 0
    %1506 = vmatprep.subr.bf16.mxu0 0
    %1507 = vmatpush1.bf16.xpose.msra.mxu0 0
    %1508 = vmatprep.subr.bf16.mxu0 0
    %1509 = vmatpush1.bf16.xpose.msra.mxu0 0
    %1510 = vmatprep.subr.bf16.mxu0 0
    %1511 = vmatpush1.bf16.xpose.msra.mxu0 0
    %1512 = vmatprep.subr.bf16.mxu0 0
    %1513 = vmatpush1.bf16.xpose.msra.mxu0 0
    %1514 = vmatprep.subr.bf16.mxu0 0
    %1515 = vmatpush1.bf16.xpose.msra.mxu0 0
    %1516 = vmatprep.subr.bf16.mxu0 0
    %1517 = vmatpush1.bf16.xpose.msra.mxu0 0
    %1518 = vmatprep.subr.bf16.mxu0 0
    %1519 = vmatpush1.bf16.xpose.msra.mxu0 0
    %1520 = vmatprep.mubr.bf16.mxu0 %v193
    %1521 = vmatmul.mubr.bf16.gmra.mrb[0].mxu0 %v192
    %v1522 = vpop.f32.mrb[0].mxu0
    %v1523 = vadd.f32 %v1483, %v1522
    %v1524 = vpop.f32.mrb[0].mxu0
    %v1525 = vpop.f32.mrb[0].mxu0
    %v1526 = vpop.f32.mrb[0].mxu0
    %1527 = vdwg.mxu0
    %1528 = vmatprep.subr.bf16.mxu0 %v867
    %1529 = vmatpush1.bf16.xpose.msra.mxu0 %v866
    %1530 = vmatprep.subr.bf16.mxu0 %v899
    %1531 = vmatpush1.bf16.xpose.msra.mxu0 %v898
    %1532 = vmatprep.subr.bf16.mxu0 %v931
    %1533 = vmatpush1.bf16.xpose.msra.mxu0 %v930
    %1534 = vmatprep.subr.bf16.mxu0 %v963
    %1535 = vmatpush1.bf16.xpose.msra.mxu0 %v962
    %1536 = vmatprep.subr.bf16.mxu0 %v995
    %1537 = vmatpush1.bf16.xpose.msra.mxu0 %v994
    %1538 = vmatprep.subr.bf16.mxu0 0
    %1539 = vmatpush1.bf16.xpose.msra.mxu0 0
    %1540 = vmatprep.subr.bf16.mxu0 0
    %1541 = vmatpush1.bf16.xpose.msra.mxu0 0
    %1542 = vmatprep.subr.bf16.mxu0 0
    %1543 = vmatpush1.bf16.xpose.msra.mxu0 0
    %1544 = vmatprep.subr.bf16.mxu0 0
    %1545 = vmatpush1.bf16.xpose.msra.mxu0 0
    %1546 = vmatprep.subr.bf16.mxu0 0
    %1547 = vmatpush1.bf16.xpose.msra.mxu0 0
    %1548 = vmatprep.subr.bf16.mxu0 0
    %1549 = vmatpush1.bf16.xpose.msra.mxu0 0
    %1550 = vmatprep.subr.bf16.mxu0 0
    %1551 = vmatpush1.bf16.xpose.msra.mxu0 0
    %1552 = vmatprep.subr.bf16.mxu0 0
    %1553 = vmatpush1.bf16.xpose.msra.mxu0 0
    %1554 = vmatprep.subr.bf16.mxu0 0
    %1555 = vmatpush1.bf16.xpose.msra.mxu0 0
    %1556 = vmatprep.subr.bf16.mxu0 0
    %1557 = vmatpush1.bf16.xpose.msra.mxu0 0
    %1558 = vmatprep.subr.bf16.mxu0 0
    %1559 = vmatpush1.bf16.xpose.msra.mxu0 0
    %1560 = vmatprep.mubr.bf16.mxu0 %v195
    %1561 = vmatmul.mubr.bf16.gmra.mrb[0].mxu0 %v194
    %v1562 = vpop.f32.mrb[0].mxu0
    %v1563 = vadd.f32 %v1523, %v1562
    %v1564 = vpop.f32.mrb[0].mxu0
    %v1565 = vpop.f32.mrb[0].mxu0
    %v1566 = vpop.f32.mrb[0].mxu0
    %1567 = vdwg.mxu0
    %1568 = vmatprep.subr.bf16.mxu0 %v869
    %1569 = vmatpush1.bf16.xpose.msra.mxu0 %v868
    %1570 = vmatprep.subr.bf16.mxu0 %v901
    %1571 = vmatpush1.bf16.xpose.msra.mxu0 %v900
    %1572 = vmatprep.subr.bf16.mxu0 %v933
    %1573 = vmatpush1.bf16.xpose.msra.mxu0 %v932
    %1574 = vmatprep.subr.bf16.mxu0 %v965
    %1575 = vmatpush1.bf16.xpose.msra.mxu0 %v964
    %1576 = vmatprep.subr.bf16.mxu0 %v997
    %1577 = vmatpush1.bf16.xpose.msra.mxu0 %v996
    %1578 = vmatprep.subr.bf16.mxu0 0
    %1579 = vmatpush1.bf16.xpose.msra.mxu0 0
    %1580 = vmatprep.subr.bf16.mxu0 0
    %1581 = vmatpush1.bf16.xpose.msra.mxu0 0
    %1582 = vmatprep.subr.bf16.mxu0 0
    %1583 = vmatpush1.bf16.xpose.msra.mxu0 0
    %1584 = vmatprep.subr.bf16.mxu0 0
    %1585 = vmatpush1.bf16.xpose.msra.mxu0 0
    %1586 = vmatprep.subr.bf16.mxu0 0
    %1587 = vmatpush1.bf16.xpose.msra.mxu0 0
    %1588 = vmatprep.subr.bf16.mxu0 0
    %1589 = vmatpush1.bf16.xpose.msra.mxu0 0
    %1590 = vmatprep.subr.bf16.mxu0 0
    %1591 = vmatpush1.bf16.xpose.msra.mxu0 0
    %1592 = vmatprep.subr.bf16.mxu0 0
    %1593 = vmatpush1.bf16.xpose.msra.mxu0 0
    %1594 = vmatprep.subr.bf16.mxu0 0
    %1595 = vmatpush1.bf16.xpose.msra.mxu0 0
    %1596 = vmatprep.subr.bf16.mxu0 0
    %1597 = vmatpush1.bf16.xpose.msra.mxu0 0
    %1598 = vmatprep.subr.bf16.mxu0 0
    %1599 = vmatpush1.bf16.xpose.msra.mxu0 0
    %1600 = vmatprep.mubr.bf16.mxu0 %v197
    %1601 = vmatmul.mubr.bf16.gmra.mrb[0].mxu0 %v196
    %v1602 = vpop.f32.mrb[0].mxu0
    %v1603 = vadd.f32 %v1563, %v1602
    %v1604 = vpop.f32.mrb[0].mxu0
    %v1605 = vpop.f32.mrb[0].mxu0
    %v1606 = vpop.f32.mrb[0].mxu0
    %1607 = vdwg.mxu0
    %1608 = vmatprep.subr.bf16.mxu0 %v871
    %1609 = vmatpush1.bf16.xpose.msra.mxu0 %v870
    %1610 = vmatprep.subr.bf16.mxu0 %v903
    %1611 = vmatpush1.bf16.xpose.msra.mxu0 %v902
    %1612 = vmatprep.subr.bf16.mxu0 %v935
    %1613 = vmatpush1.bf16.xpose.msra.mxu0 %v934
    %1614 = vmatprep.subr.bf16.mxu0 %v967
    %1615 = vmatpush1.bf16.xpose.msra.mxu0 %v966
    %1616 = vmatprep.subr.bf16.mxu0 %v999
    %1617 = vmatpush1.bf16.xpose.msra.mxu0 %v998
    %1618 = vmatprep.subr.bf16.mxu0 0
    %1619 = vmatpush1.bf16.xpose.msra.mxu0 0
    %1620 = vmatprep.subr.bf16.mxu0 0
    %1621 = vmatpush1.bf16.xpose.msra.mxu0 0
    %1622 = vmatprep.subr.bf16.mxu0 0
    %1623 = vmatpush1.bf16.xpose.msra.mxu0 0
    %1624 = vmatprep.subr.bf16.mxu0 0
    %1625 = vmatpush1.bf16.xpose.msra.mxu0 0
    %1626 = vmatprep.subr.bf16.mxu0 0
    %1627 = vmatpush1.bf16.xpose.msra.mxu0 0
    %1628 = vmatprep.subr.bf16.mxu0 0
    %1629 = vmatpush1.bf16.xpose.msra.mxu0 0
    %1630 = vmatprep.subr.bf16.mxu0 0
    %1631 = vmatpush1.bf16.xpose.msra.mxu0 0
    %1632 = vmatprep.subr.bf16.mxu0 0
    %1633 = vmatpush1.bf16.xpose.msra.mxu0 0
    %1634 = vmatprep.subr.bf16.mxu0 0
    %1635 = vmatpush1.bf16.xpose.msra.mxu0 0
    %1636 = vmatprep.subr.bf16.mxu0 0
    %1637 = vmatpush1.bf16.xpose.msra.mxu0 0
    %1638 = vmatprep.subr.bf16.mxu0 0
    %1639 = vmatpush1.bf16.xpose.msra.mxu0 0
    %1640 = vmatprep.mubr.bf16.mxu0 %v199
    %1641 = vmatmul.mubr.bf16.gmra.mrb[0].mxu0 %v198
    %v1642 = vpop.f32.mrb[0].mxu0
    %v1643 = vadd.f32 %v1603, %v1642
    %v1644 = vpop.f32.mrb[0].mxu0
    %v1645 = vpop.f32.mrb[0].mxu0
    %v1646 = vpop.f32.mrb[0].mxu0
    %1647 = vdwg.mxu0
    %1648 = vmatprep.subr.bf16.mxu0 %v873
    %1649 = vmatpush1.bf16.xpose.msra.mxu0 %v872
    %1650 = vmatprep.subr.bf16.mxu0 %v905
    %1651 = vmatpush1.bf16.xpose.msra.mxu0 %v904
    %1652 = vmatprep.subr.bf16.mxu0 %v937
    %1653 = vmatpush1.bf16.xpose.msra.mxu0 %v936
    %1654 = vmatprep.subr.bf16.mxu0 %v969
    %1655 = vmatpush1.bf16.xpose.msra.mxu0 %v968
    %1656 = vmatprep.subr.bf16.mxu0 %v1001
    %1657 = vmatpush1.bf16.xpose.msra.mxu0 %v1000
    %1658 = vmatprep.subr.bf16.mxu0 0
    %1659 = vmatpush1.bf16.xpose.msra.mxu0 0
    %1660 = vmatprep.subr.bf16.mxu0 0
    %1661 = vmatpush1.bf16.xpose.msra.mxu0 0
    %1662 = vmatprep.subr.bf16.mxu0 0
    %1663 = vmatpush1.bf16.xpose.msra.mxu0 0
    %1664 = vmatprep.subr.bf16.mxu0 0
    %1665 = vmatpush1.bf16.xpose.msra.mxu0 0
    %1666 = vmatprep.subr.bf16.mxu0 0
    %1667 = vmatpush1.bf16.xpose.msra.mxu0 0
    %1668 = vmatprep.subr.bf16.mxu0 0
    %1669 = vmatpush1.bf16.xpose.msra.mxu0 0
    %1670 = vmatprep.subr.bf16.mxu0 0
    %1671 = vmatpush1.bf16.xpose.msra.mxu0 0
    %1672 = vmatprep.subr.bf16.mxu0 0
    %1673 = vmatpush1.bf16.xpose.msra.mxu0 0
    %1674 = vmatprep.subr.bf16.mxu0 0
    %1675 = vmatpush1.bf16.xpose.msra.mxu0 0
    %1676 = vmatprep.subr.bf16.mxu0 0
    %1677 = vmatpush1.bf16.xpose.msra.mxu0 0
    %1678 = vmatprep.subr.bf16.mxu0 0
    %1679 = vmatpush1.bf16.xpose.msra.mxu0 0
    %1680 = vmatprep.mubr.bf16.mxu0 %v201
    %1681 = vmatmul.mubr.bf16.gmra.mrb[0].mxu0 %v200
    %v1682 = vpop.f32.mrb[0].mxu0
    %v1683 = vadd.f32 %v1643, %v1682
    %v1684 = vpop.f32.mrb[0].mxu0
    %v1685 = vpop.f32.mrb[0].mxu0
    %v1686 = vpop.f32.mrb[0].mxu0
    %1687 = vdwg.mxu0
    %1688 = vmatprep.subr.bf16.mxu0 %v875
    %1689 = vmatpush1.bf16.xpose.msra.mxu0 %v874
    %1690 = vmatprep.subr.bf16.mxu0 %v907
    %1691 = vmatpush1.bf16.xpose.msra.mxu0 %v906
    %1692 = vmatprep.subr.bf16.mxu0 %v939
    %1693 = vmatpush1.bf16.xpose.msra.mxu0 %v938
    %1694 = vmatprep.subr.bf16.mxu0 %v971
    %1695 = vmatpush1.bf16.xpose.msra.mxu0 %v970
    %1696 = vmatprep.subr.bf16.mxu0 %v1003
    %1697 = vmatpush1.bf16.xpose.msra.mxu0 %v1002
    %1698 = vmatprep.subr.bf16.mxu0 0
    %1699 = vmatpush1.bf16.xpose.msra.mxu0 0
    %1700 = vmatprep.subr.bf16.mxu0 0
    %1701 = vmatpush1.bf16.xpose.msra.mxu0 0
    %1702 = vmatprep.subr.bf16.mxu0 0
    %1703 = vmatpush1.bf16.xpose.msra.mxu0 0
    %1704 = vmatprep.subr.bf16.mxu0 0
    %1705 = vmatpush1.bf16.xpose.msra.mxu0 0
    %1706 = vmatprep.subr.bf16.mxu0 0
    %1707 = vmatpush1.bf16.xpose.msra.mxu0 0
    %1708 = vmatprep.subr.bf16.mxu0 0
    %1709 = vmatpush1.bf16.xpose.msra.mxu0 0
    %1710 = vmatprep.subr.bf16.mxu0 0
    %1711 = vmatpush1.bf16.xpose.msra.mxu0 0
    %1712 = vmatprep.subr.bf16.mxu0 0
    %1713 = vmatpush1.bf16.xpose.msra.mxu0 0
    %1714 = vmatprep.subr.bf16.mxu0 0
    %1715 = vmatpush1.bf16.xpose.msra.mxu0 0
    %1716 = vmatprep.subr.bf16.mxu0 0
    %1717 = vmatpush1.bf16.xpose.msra.mxu0 0
    %1718 = vmatprep.subr.bf16.mxu0 0
    %1719 = vmatpush1.bf16.xpose.msra.mxu0 0
    %1720 = vmatprep.mubr.bf16.mxu0 %v203
    %1721 = vmatmul.mubr.bf16.gmra.mrb[0].mxu0 %v202
    %v1722 = vpop.f32.mrb[0].mxu0
    %v1723 = vadd.f32 %v1683, %v1722
    %v1724 = vpop.f32.mrb[0].mxu0
    %v1725 = vpop.f32.mrb[0].mxu0
    %v1726 = vpop.f32.mrb[0].mxu0
    %1727 = vdwg.mxu0
    %1728 = vmatprep.subr.bf16.mxu0 %v877
    %1729 = vmatpush1.bf16.xpose.msra.mxu0 %v876
    %1730 = vmatprep.subr.bf16.mxu0 %v909
    %1731 = vmatpush1.bf16.xpose.msra.mxu0 %v908
    %1732 = vmatprep.subr.bf16.mxu0 %v941
    %1733 = vmatpush1.bf16.xpose.msra.mxu0 %v940
    %1734 = vmatprep.subr.bf16.mxu0 %v973
    %1735 = vmatpush1.bf16.xpose.msra.mxu0 %v972
    %1736 = vmatprep.subr.bf16.mxu0 %v1005
    %1737 = vmatpush1.bf16.xpose.msra.mxu0 %v1004
    %1738 = vmatprep.subr.bf16.mxu0 0
    %1739 = vmatpush1.bf16.xpose.msra.mxu0 0
    %1740 = vmatprep.subr.bf16.mxu0 0
    %1741 = vmatpush1.bf16.xpose.msra.mxu0 0
    %1742 = vmatprep.subr.bf16.mxu0 0
    %1743 = vmatpush1.bf16.xpose.msra.mxu0 0
    %1744 = vmatprep.subr.bf16.mxu0 0
    %1745 = vmatpush1.bf16.xpose.msra.mxu0 0
    %1746 = vmatprep.subr.bf16.mxu0 0
    %1747 = vmatpush1.bf16.xpose.msra.mxu0 0
    %1748 = vmatprep.subr.bf16.mxu0 0
    %1749 = vmatpush1.bf16.xpose.msra.mxu0 0
    %1750 = vmatprep.subr.bf16.mxu0 0
    %1751 = vmatpush1.bf16.xpose.msra.mxu0 0
    %1752 = vmatprep.subr.bf16.mxu0 0
    %1753 = vmatpush1.bf16.xpose.msra.mxu0 0
    %1754 = vmatprep.subr.bf16.mxu0 0
    %1755 = vmatpush1.bf16.xpose.msra.mxu0 0
    %1756 = vmatprep.subr.bf16.mxu0 0
    %1757 = vmatpush1.bf16.xpose.msra.mxu0 0
    %1758 = vmatprep.subr.bf16.mxu0 0
    %1759 = vmatpush1.bf16.xpose.msra.mxu0 0
    %1760 = vmatprep.mubr.bf16.mxu0 %v205
    %1761 = vmatmul.mubr.bf16.gmra.mrb[0].mxu0 %v204
    %v1762 = vpop.f32.mrb[0].mxu0
    %v1763 = vadd.f32 %v1723, %v1762
    %v1764 = vpop.f32.mrb[0].mxu0
    %v1765 = vpop.f32.mrb[0].mxu0
    %v1766 = vpop.f32.mrb[0].mxu0
    %1767 = vdwg.mxu0
    %1768 = vmatprep.subr.bf16.mxu0 %v879
    %1769 = vmatpush1.bf16.xpose.msra.mxu0 %v878
    %1770 = vmatprep.subr.bf16.mxu0 %v911
    %1771 = vmatpush1.bf16.xpose.msra.mxu0 %v910
    %1772 = vmatprep.subr.bf16.mxu0 %v943
    %1773 = vmatpush1.bf16.xpose.msra.mxu0 %v942
    %1774 = vmatprep.subr.bf16.mxu0 %v975
    %1775 = vmatpush1.bf16.xpose.msra.mxu0 %v974
    %1776 = vmatprep.subr.bf16.mxu0 %v1007
    %1777 = vmatpush1.bf16.xpose.msra.mxu0 %v1006
    %1778 = vmatprep.subr.bf16.mxu0 0
    %1779 = vmatpush1.bf16.xpose.msra.mxu0 0
    %1780 = vmatprep.subr.bf16.mxu0 0
    %1781 = vmatpush1.bf16.xpose.msra.mxu0 0
    %1782 = vmatprep.subr.bf16.mxu0 0
    %1783 = vmatpush1.bf16.xpose.msra.mxu0 0
    %1784 = vmatprep.subr.bf16.mxu0 0
    %1785 = vmatpush1.bf16.xpose.msra.mxu0 0
    %1786 = vmatprep.subr.bf16.mxu0 0
    %1787 = vmatpush1.bf16.xpose.msra.mxu0 0
    %1788 = vmatprep.subr.bf16.mxu0 0
    %1789 = vmatpush1.bf16.xpose.msra.mxu0 0
    %1790 = vmatprep.subr.bf16.mxu0 0
    %1791 = vmatpush1.bf16.xpose.msra.mxu0 0
    %1792 = vmatprep.subr.bf16.mxu0 0
    %1793 = vmatpush1.bf16.xpose.msra.mxu0 0
    %1794 = vmatprep.subr.bf16.mxu0 0
    %1795 = vmatpush1.bf16.xpose.msra.mxu0 0
    %1796 = vmatprep.subr.bf16.mxu0 0
    %1797 = vmatpush1.bf16.xpose.msra.mxu0 0
    %1798 = vmatprep.subr.bf16.mxu0 0
    %1799 = vmatpush1.bf16.xpose.msra.mxu0 0
    %1800 = vmatprep.mubr.bf16.mxu0 %v207
    %1801 = vmatmul.mubr.bf16.gmra.mrb[0].mxu0 %v206
    %v1802 = vpop.f32.mrb[0].mxu0
    %v1803 = vadd.f32 %v1763, %v1802
    %v1804 = vpop.f32.mrb[0].mxu0
    %v1805 = vpop.f32.mrb[0].mxu0
    %v1806 = vpop.f32.mrb[0].mxu0
    %1807 = vdwg.mxu0
    %vm1808 = vcmask 654336
    %v1809 = vsel %vm1808, %v1803, -inf
    %1810 = vmax.xlane.f32.xlu0 %v1809
    %v1811 = vpop.xlane.xlu0 %1810
    %v1812 = vsub.f32 %v1803, %v1811
    %v1813 = vmul.f32 %v1812, 1.442695
    %v1814 = vpow.pop %v1813
    %v1815 = vsel %vm1808, %v1814, 0.0
    %1816 = vadd.xlane.f32.xlu0 %v1815
    %v1817 = vpop.xlane.xlu0 %1816
    %v1818 = vlog2.pop %v1817
    %v1819 = vmul.f32 %v1818, 0.6931472
    %v1820 = vsub.f32 %v1812, %v1819
    %v1821 = vlaneseq
    %v1822 = vshrl.u32 %v1821, 7
    %v1823 = vlaneseq
    %v1824 = vand.u32 %v1823, 127
    %vm1825 = vcmp.eq.s32.totalorder %v1822, 0
    %s1826 = sld [smem:[#allocation3]]
    %v1827 = vstv %s1826
    %vm1828 = vcmp.eq.s32.totalorder %v1824, %v1827
    %vm1829 = vmand %vm1825, %vm1828
    %vm1830 = vcmp.eq.s32.totalorder %v1822, 1
    %s1831 = sld [smem:[#allocation3 + $0x1]]
    %v1832 = vstv %s1831
    %vm1833 = vcmp.eq.s32.totalorder %v1824, %v1832
    %vm1834 = vmand %vm1830, %vm1833
    %vm1835 = vmor %vm1829, %vm1834
    %vm1836 = vcmp.eq.s32.totalorder %v1822, 2
    %s1837 = sld [smem:[#allocation3 + $0x2]]
    %v1838 = vstv %s1837
    %vm1839 = vcmp.eq.s32.totalorder %v1824, %v1838
    %vm1840 = vmand %vm1836, %vm1839
    %vm1841 = vmor %vm1835, %vm1840
    %vm1842 = vcmp.eq.s32.totalorder %v1822, 3
    %s1843 = sld [smem:[#allocation3 + $0x3]]
    %v1844 = vstv %s1843
    %vm1845 = vcmp.eq.s32.totalorder %v1824, %v1844
    %vm1846 = vmand %vm1842, %vm1845
    %vm1847 = vmor %vm1841, %vm1846
    %vm1848 = vcmp.eq.s32.totalorder %v1822, 4
    %s1849 = sld [smem:[#allocation3 + $0x4]]
    %v1850 = vstv %s1849
    %vm1851 = vcmp.eq.s32.totalorder %v1824, %v1850
    %vm1852 = vmand %vm1848, %vm1851
    %vm1853 = vmor %vm1847, %vm1852
    %vm1854 = vcmp.eq.s32.totalorder %v1822, 5
    %s1855 = sld [smem:[#allocation3 + $0x5]]
    %v1856 = vstv %s1855
    %vm1857 = vcmp.eq.s32.totalorder %v1824, %v1856
    %vm1858 = vmand %vm1854, %vm1857
    %vm1859 = vmor %vm1853, %vm1858
    %vm1860 = vcmp.eq.s32.totalorder %v1822, 6
    %s1861 = sld [smem:[#allocation3 + $0x6]]
    %v1862 = vstv %s1861
    %vm1863 = vcmp.eq.s32.totalorder %v1824, %v1862
    %vm1864 = vmand %vm1860, %vm1863
    %vm1865 = vmor %vm1859, %vm1864
    %vm1866 = vcmp.eq.s32.totalorder %v1822, 7
    %s1867 = sld [smem:[#allocation3 + $0x7]]
    %v1868 = vstv %s1867
    %vm1869 = vcmp.eq.s32.totalorder %v1824, %v1868
    %vm1870 = vmand %vm1866, %vm1869
    %vm1871 = vmor %vm1865, %vm1870
    %v1872 = vsel %vm1871, 0.9, 0.0012658228
    %v1873 = vsub.f32 0.0, %v1872
    %v1874 = vmul.f32 %v1873, %v1820
    %v1875 = vsel %vm1808, %v1874, 0.0
    %1876 = vadd.xlane.f32.xlu0 %v1875
    %v1877 = vpop.xlane.xlu0 %1876
    %v1878 = vrot.slane %v1877, 4
    %v1879 = vadd.f32 %v1877, %v1878
    %v1880 = vrot.slane %v1879, 2
    %v1881 = vadd.f32 %v1879, %v1880
    %v1882 = vrot.slane %v1881, 1
    %v1883 = vadd.f32 %v1881, %v1882
    %v1884 = vrcp.pop 8.0
    %v1885 = vmul.f32 %v1883, %v1884
    %vm1886 = vcmask 0
    %1887 = vst.msk [vmem:[#allocation9] sm:$0x1] %vm1886, %v1885
    // Predicated region
    $region18: #{tpu_custom_call.1} parent=1 // pred_check
      _
    $region19: #{tpu_custom_call.1} parent=1 // pred_check_branch
      %1889 = sbr.rel (0) target = $region21
    $region20: #{tpu_custom_call.1} parent=1 // pred_region
      %s1891 = ssub.s32 16, 16
      %1892 = vsyncadd [#allocation6], %s1891
      %s1894 = sshll.u32 [#allocation9], 4
      %s1895 = int_to_ptr.vmem [resolvable:$true] %s1894
      %1897 = dma.vmem_to_hbm [thread:$0]  %s1895, 16, %s3, [#allocation6]
    $region21: #{tpu_custom_call.1} parent=1 // pred_fallthru
      _
    // Predicated region
    $region22: #{tpu_custom_call.1} parent=1 // pred_check
      _
    $region23: #{tpu_custom_call.1} parent=1 // pred_check_branch
      %1899 = sbr.rel (0) target = $region25
    $region24: #{tpu_custom_call.1} parent=1 // pred_region
      %1900 = dma.done [#allocation6], 16
    $region25: #{tpu_custom_call.1} parent=1 // pred_fallthru
      _
    %1901 = vsyncpa [#allocation5], 1
    %1902 = vsyncpa [#allocation8], 1
    %1903 = vsyncpa [#allocation6], 1

</llo_original>
